<compile_context>
chip_gen: v7x
topology: tpu7x:2x2x1
jax: 0.10.0
libtpu: 0.0.40
codegen_flags: <defaults>
</compile_context>

<pallas_src>
import functools

import jax
import jax.numpy as jnp
from jax import lax
from jax.experimental import pallas as pl
from jax.experimental.pallas import tpu as pltpu


def _layernorm(v, w, b, eps=1e-5):
    mu = jnp.mean(v, axis=-1, keepdims=True)
    var = jnp.mean((v - mu) ** 2, axis=-1, keepdims=True)
    return (v - mu) * lax.rsqrt(var + eps) * w + b


def transformer_kernel(x_ref,
                       ln1_w_ref, ln1_b_ref, wqkv_ref, bqkv_ref, wo_ref, bo_ref,
                       ln2_w_ref, ln2_b_ref, wfc_ref, bfc_ref, wproj_ref,
                       bproj_ref, o_ref, xres_ref, *, n_head):
    """One (batch, layer) grid step: one ResidualAttentionBlock on one (L, E)
    sequence, with the residual stream carried in `xres_ref` across layers.

    Weights arrive pre-transposed ((in, out) layout, bf16, Q-scale folded);
    matmuls accumulate in f32; LN / softmax / GELU / residuals are f32.
    """
    layer = pl.program_id(1)
    cdt = wqkv_ref.dtype                          # matmul operand dtype (bf16)
    L, E = xres_ref.shape
    dh = E // n_head

    @pl.when(layer == 0)
    def _():
        xres_ref[...] = x_ref[0].astype(jnp.float32)

    x = xres_ref[...]                             # (L, E) f32 residual stream

    # ---- attention branch: x + out_proj(MHA(ln_1(x))) ----
    h = _layernorm(x, ln1_w_ref[0], ln1_b_ref[0]).astype(cdt)
    qkv = jnp.dot(h, wqkv_ref[0],
                  preferred_element_type=jnp.float32) + bqkv_ref[0]   # (L, 3E)

    # Head split without lane-splitting reshapes: one 2-D transpose to
    # feature-major, then split the (major) feature axis -> (H, dh, L).
    qkv_t = qkv.T                                          # (3E, L) f32
    q_hdl = qkv_t[0:E].reshape(n_head, dh, L)
    k_hdl = qkv_t[E:2 * E].reshape(n_head, dh, L)
    v_hdl = qkv_t[2 * E:3 * E].reshape(n_head, dh, L)
    q_hld = jnp.transpose(q_hdl, (0, 2, 1)).astype(cdt)    # (H, L, dh)

    # TODO(synk): for long sequences (L >~ 1-2K) replace with KV-tiled
    # flash-style online softmax to avoid the O(L^2) f32 score tensor.
    s = jnp.einsum('hqd,hdk->hqk', q_hld, k_hdl.astype(cdt),
                   preferred_element_type=jnp.float32)     # (H, L, L)
    s = s - jnp.max(s, axis=-1, keepdims=True)
    p = jnp.exp(s)
    inv = pl.reciprocal(jnp.sum(p, axis=-1), approx=True)  # (H, L) per query
    o_hdq = jnp.einsum('hdk,hqk->hdq', v_hdl.astype(cdt), p.astype(cdt),
                       preferred_element_type=jnp.float32)  # (H, dh, L)
    o_hdq = o_hdq * inv[:, None, :]
    attn_in = o_hdq.reshape(E, L).T.astype(cdt)             # (L, E), heads concat
    attn = jnp.dot(attn_in, wo_ref[0],
                   preferred_element_type=jnp.float32) + bo_ref[0]
    x = x + attn

    # ---- MLP branch: x + c_proj(gelu(c_fc(ln_2(x)))) ----
    h2 = _layernorm(x, ln2_w_ref[0], ln2_b_ref[0]).astype(cdt)
    y = jnp.dot(h2, wfc_ref[0],
                preferred_element_type=jnp.float32) + bfc_ref[0]
    y = 0.5 * y * (1.0 + lax.erf(y * (2.0 ** -0.5)))         # exact-erf GELU
    y = jnp.dot(y.astype(cdt), wproj_ref[0],
                preferred_element_type=jnp.float32) + bproj_ref[0]
    x = x + y

    xres_ref[...] = x

    @pl.when(layer == pl.num_programs(1) - 1)
    def _():
        o_ref[0] = x.astype(o_ref.dtype)


def prep_transformer_params(layer_params, n_head, compute_dtype=jnp.bfloat16):
    """PyTorch-shaped f32 params -> stacked kernel layout, done ONCE.

    Weights are pre-transposed to (in, out) and cast to the compute dtype;
    1/sqrt(dh) is folded into the Q columns of wqkv/bqkv; LN params and biases
    stay f32.  Returns a tuple of 12 arrays with a leading layer dimension.
    """
    f32 = jnp.float32
    E = layer_params[0]["ln1_w"].shape[0]
    dh = E // n_head
    qscale = jnp.concatenate(
        [jnp.full((E,), dh ** -0.5, f32), jnp.ones((2 * E,), f32)])

    def one(p):
        wqkv = jnp.transpose(p["wqkv"]).astype(f32) * qscale[None, :]
        bqkv = p["bqkv"].astype(f32) * qscale
        return (
            p["ln1_w"].reshape(1, -1).astype(f32),
            p["ln1_b"].reshape(1, -1).astype(f32),
            wqkv.astype(compute_dtype),                       # (E, 3E)
            bqkv.reshape(1, -1),
            jnp.transpose(p["wo"]).astype(compute_dtype),     # (E, E)
            p["bo"].reshape(1, -1).astype(f32),
            p["ln2_w"].reshape(1, -1).astype(f32),
            p["ln2_b"].reshape(1, -1).astype(f32),
            jnp.transpose(p["wfc"]).astype(compute_dtype),    # (E, mlp)
            p["bfc"].reshape(1, -1).astype(f32),
            jnp.transpose(p["wproj"]).astype(compute_dtype),  # (mlp, E)
            p["bproj"].reshape(1, -1).astype(f32),
        )

    per_layer = [one(p) for p in layer_params]
    return tuple(jnp.stack([lay[i] for lay in per_layer]) for i in range(12))


def _vmem_limit_bytes(L, E, mlp_width, n_head, itemsize):
    """Resident-set estimate with headroom, capped per TPU generation."""
    # Double-buffered per-layer weights (+ small f32 biases / LN params).
    w = 2 * ((3 * E * E + E * E + 2 * E * mlp_width) * itemsize
             + (8 * E + mlp_width) * 4)
    # Activation blocks (in + out, double-buffered) + residual scratch (f32).
    act = (2 + 2 + 1) * L * E * 4
    # Largest in-kernel f32 intermediates (qkv, scores+probs, mlp hidden, misc).
    interm = (3 * L * E + 2 * n_head * L * L + L * mlp_width + 2 * L * E) * 4
    need = int(1.5 * (w + act + interm))
    try:
        phys = int(pltpu.get_tpu_info().vmem_capacity_bytes)
    except Exception:  # pragma: no cover - fall back to the smallest (v7x) VMEM
        phys = 64 * 2 ** 20
    if not phys:
        phys = 64 * 2 ** 20
    cap = phys - max(8 * 2 ** 20, phys // 8)   # headroom for compiler scratch
    # TODO(synk): if per-layer weights exceed `cap` (very large widths on
    # v7x's 64 MiB VMEM), K-tile wfc/wproj across an extra grid axis.
    return max(32 * 2 ** 20, min(need, cap))


def transformer_pallas(x_nle, prepped, n_head):
    """Full Transformer stack in one pallas_call.  x_nle: (N, L, E)."""
    N, L, E = x_nle.shape
    num_layers = prepped[0].shape[0]
    mlp_width = prepped[8].shape[-1]
    cdt = prepped[2].dtype

    in_specs = [pl.BlockSpec((1, L, E), lambda b, l: (b, 0, 0))]
    # Weight/bias blocks are indexed by the layer grid axis, so the default
    # double buffering prefetches layer l+1's weights under layer l's compute.
    in_specs += [pl.BlockSpec((1,) + a.shape[1:], lambda b, l: (l, 0, 0))
                 for a in prepped]

    # TODO(synk): for small L, process several sequences per grid step to fill
    # the MXU M dimension; for N == 1 on v7x, add a second parallel grid axis.
    return pl.pallas_call(
        functools.partial(transformer_kernel, n_head=n_head),
        out_shape=jax.ShapeDtypeStruct((N, L, E), x_nle.dtype),
        grid=(N, num_layers),
        in_specs=in_specs,
        out_specs=pl.BlockSpec((1, L, E), lambda b, l: (b, 0, 0)),
        scratch_shapes=[pltpu.VMEM((L, E), jnp.float32)],
        compiler_params=pltpu.CompilerParams(
            dimension_semantics=("parallel", "arbitrary"),
            vmem_limit_bytes=_vmem_limit_bytes(
                L, E, mlp_width, n_head, jnp.dtype(cdt).itemsize)),
    )(x_nle, *prepped)


def transformer_forward(x_lne, prepped, n_head):
    """Transformer.forward; x_lne: (L, N, E), attn_mask=key_padding_mask=None."""
    x = jnp.transpose(x_lne, (1, 0, 2))           # -> (N, L, E) for the kernel
    x = transformer_pallas(x, prepped, n_head)
    return jnp.transpose(x, (1, 0, 2))            # back to (L, N, E)


def init_params(key, width, layers, mlp_ratio=4.0):
    """Deterministic synthetic parameters with PyTorch state-dict shapes."""
    mlp_width = int(width * mlp_ratio)
    params = []
    for _ in range(layers):
        key, k0, k1, k2, k3, k4 = jax.random.split(key, 6)
        params.append(dict(
            ln1_w=jnp.ones((width,), jnp.float32),
            ln1_b=jnp.zeros((width,), jnp.float32),
            wqkv=0.02 * jax.random.normal(k0, (3 * width, width), jnp.float32),
            bqkv=0.02 * jax.random.normal(k1, (3 * width,), jnp.float32),
            wo=0.02 * jax.random.normal(k2, (width, width), jnp.float32),
            bo=jnp.zeros((width,), jnp.float32),
            ln2_w=jnp.ones((width,), jnp.float32),
            ln2_b=jnp.zeros((width,), jnp.float32),
            wfc=0.02 * jax.random.normal(k3, (mlp_width, width), jnp.float32),
            bfc=jnp.zeros((mlp_width,), jnp.float32),
            wproj=0.02 * jax.random.normal(k4, (width, mlp_width), jnp.float32),
            bproj=jnp.zeros((width,), jnp.float32),
        ))
    return params


def ref_forward(x_lne, layer_params, n_head):
    """Pure-JAX f32 reference mirroring torch.nn.MultiheadAttention semantics."""
    x = x_lne.astype(jnp.float32)
    L, N, E = x.shape
    dh = E // n_head
    for p in layer_params:
        h = _layernorm(x, p["ln1_w"], p["ln1_b"])
        qkv = h @ p["wqkv"].T + p["bqkv"]
        q, k, v = jnp.split(qkv, 3, axis=-1)
        to_heads = lambda t: t.reshape(L, N, n_head, dh).transpose(1, 2, 0, 3)
        q, k, v = to_heads(q), to_heads(k), to_heads(v)
        s = jnp.einsum('nhld,nhmd->nhlm', q, k) / (dh ** 0.5)
        a = jax.nn.softmax(s, axis=-1)
        o = jnp.einsum('nhlm,nhmd->nhld', a, v)
        o = o.transpose(2, 0, 1, 3).reshape(L, N, E)
        x = x + (o @ p["wo"].T + p["bo"])
        h2 = _layernorm(x, p["ln2_w"], p["ln2_b"])
        y = h2 @ p["wfc"].T + p["bfc"]
        y = 0.5 * y * (1.0 + lax.erf(y * (2.0 ** -0.5)))
        y = y @ p["wproj"].T + p["bproj"]
        x = x + y
    return x


if __name__ == "__main__":
    width, layers, heads = 32, 2, 4
    seq_len, batch = 8, 2

    key = jax.random.PRNGKey(0)
    kx, kp = jax.random.split(key)
    x = jax.random.normal(kx, (seq_len, batch, width), jnp.float32)   # (L, N, E)
    params = init_params(kp, width, layers)

    # Weight prep (transpose + bf16 cast + stacking) happens ONCE, outside the
    # per-forward path; the jitted forward only runs the fused Pallas kernel.
    prepped = prep_transformer_params(params, heads)

    fwd = jax.jit(functools.partial(transformer_forward, n_head=heads))
    out = jax.block_until_ready(fwd(x, prepped))

    ref = ref_forward(x, params, heads)
    assert out.shape == (seq_len, batch, width)
    err = float(jnp.max(jnp.abs(out - ref)))
    # bf16 matmul operands with f32 accumulation -> bf16-sized tolerance.
    assert err < 2e-2, f"Pallas output mismatch, max abs err = {err}"
    print("KERNEL_OK")
</pallas_src>

<mosaic_0001>
module attributes {stable_mosaic.version = 11 : i64} {
  func.func @transformer_kernel(%arg0: i32, %arg1: i32, %arg2: memref<1x8x32xf32, #tpu.memory_space<vmem>>, %arg3: memref<1x1x32xf32, #tpu.memory_space<vmem>>, %arg4: memref<1x1x32xf32, #tpu.memory_space<vmem>>, %arg5: memref<1x32x96xbf16, #tpu.memory_space<vmem>>, %arg6: memref<1x1x96xf32, #tpu.memory_space<vmem>>, %arg7: memref<1x32x32xbf16, #tpu.memory_space<vmem>>, %arg8: memref<1x1x32xf32, #tpu.memory_space<vmem>>, %arg9: memref<1x1x32xf32, #tpu.memory_space<vmem>>, %arg10: memref<1x1x32xf32, #tpu.memory_space<vmem>>, %arg11: memref<1x32x128xbf16, #tpu.memory_space<vmem>>, %arg12: memref<1x1x128xf32, #tpu.memory_space<vmem>>, %arg13: memref<1x128x32xbf16, #tpu.memory_space<vmem>>, %arg14: memref<1x1x32xf32, #tpu.memory_space<vmem>>, %arg15: memref<1x8x32xf32, #tpu.memory_space<vmem>>, %arg16: memref<8x32xf32, #tpu.memory_space<vmem>>) attributes {dimension_semantics = [#tpu.dimension_semantics<parallel>, #tpu.dimension_semantics<arbitrary>], iteration_bounds = array<i64: 2, 2>, scalar_prefetch = 0 : i64, scratch_operands = 1 : i64, tpu.core_type = #tpu.core_type<tc>, window_params = [{transform_indices = @transform_0, window_bounds = array<i64: 1, 8, 32>}, {transform_indices = @transform_1, window_bounds = array<i64: 1, 1, 32>}, {transform_indices = @transform_2, window_bounds = array<i64: 1, 1, 32>}, {transform_indices = @transform_3, window_bounds = array<i64: 1, 32, 96>}, {transform_indices = @transform_4, window_bounds = array<i64: 1, 1, 96>}, {transform_indices = @transform_5, window_bounds = array<i64: 1, 32, 32>}, {transform_indices = @transform_6, window_bounds = array<i64: 1, 1, 32>}, {transform_indices = @transform_7, window_bounds = array<i64: 1, 1, 32>}, {transform_indices = @transform_8, window_bounds = array<i64: 1, 1, 32>}, {transform_indices = @transform_9, window_bounds = array<i64: 1, 32, 128>}, {transform_indices = @transform_10, window_bounds = array<i64: 1, 1, 128>}, {transform_indices = @transform_11, window_bounds = array<i64: 1, 128, 32>}, {transform_indices = @transform_12, window_bounds = array<i64: 1, 1, 32>}, {transform_indices = @transform_13, window_bounds = array<i64: 1, 8, 32>}]} {
    %c0_i32 = arith.constant 0 : i32
    %0 = arith.cmpi eq, %arg1, %c0_i32 : i32
    %1 = arith.extui %0 : i1 to i32
    %c0_i32_0 = arith.constant 0 : i32
    %2 = arith.cmpi ne, %1, %c0_i32_0 : i32
    scf.if %2 {
      %c0_61 = arith.constant 0 : index
      %c0_62 = arith.constant 0 : index
      %c0_63 = arith.constant 0 : index
      %128 = vector.load %arg2[%c0_61, %c0_62, %c0_63] : memref<1x8x32xf32, #tpu.memory_space<vmem>>, vector<1x8x32xf32>
      %129 = vector.shape_cast %128 : vector<1x8x32xf32> to vector<8x32xf32>
      %c0_64 = arith.constant 0 : index
      %c0_65 = arith.constant 0 : index
      %130 = vector.load %arg16[%c0_64, %c0_65] : memref<8x32xf32, #tpu.memory_space<vmem>>, vector<8x32xf32>
      tpu.vector_store %arg16[%c0_64, %c0_65], %129 {strides = array<i32>} : memref<8x32xf32, #tpu.memory_space<vmem>>, vector<8x32xf32>,
    } else {
    }
    %c0 = arith.constant 0 : index
    %c0_1 = arith.constant 0 : index
    %3 = vector.load %arg16[%c0, %c0_1] : memref<8x32xf32, #tpu.memory_space<vmem>>, vector<8x32xf32>
    %c0_2 = arith.constant 0 : index
    %c0_3 = arith.constant 0 : index
    %c0_4 = arith.constant 0 : index
    %4 = vector.load %arg3[%c0_2, %c0_3, %c0_4] : memref<1x1x32xf32, #tpu.memory_space<vmem>>, vector<1x1x32xf32>
    %5 = vector.shape_cast %4 : vector<1x1x32xf32> to vector<1x32xf32>
    %c0_5 = arith.constant 0 : index
    %c0_6 = arith.constant 0 : index
    %c0_7 = arith.constant 0 : index
    %6 = vector.load %arg4[%c0_5, %c0_6, %c0_7] : memref<1x1x32xf32, #tpu.memory_space<vmem>>, vector<1x1x32xf32>
    %7 = vector.shape_cast %6 : vector<1x1x32xf32> to vector<1x32xf32>
    %cst = arith.constant dense<0.000000e+00> : vector<8xf32>
    %8 = vector.multi_reduction <add>, %3, %cst [1] : vector<8x32xf32> to vector<8xf32>
    %9 = vector.shape_cast %8 : vector<8xf32> to vector<8x1xf32>
    %cst_8 = arith.constant 3.200000e+01 : f32
    %10 = vector.broadcast %cst_8 : f32 to vector<8x1xf32>
    %11 = arith.divf %9, %10 : vector<8x1xf32>
    %12 = vector.broadcast %11 : vector<8x1xf32> to vector<8x32xf32>
    %13 = arith.subf %3, %12 : vector<8x32xf32>
    %14 = arith.mulf %13, %13 : vector<8x32xf32>
    %cst_9 = arith.constant dense<0.000000e+00> : vector<8xf32>
    %15 = vector.multi_reduction <add>, %14, %cst_9 [1] : vector<8x32xf32> to vector<8xf32>
    %16 = vector.shape_cast %15 : vector<8xf32> to vector<8x1xf32>
    %cst_10 = arith.constant 3.200000e+01 : f32
    %17 = vector.broadcast %cst_10 : f32 to vector<8x1xf32>
    %18 = arith.divf %16, %17 : vector<8x1xf32>
    %19 = vector.broadcast %11 : vector<8x1xf32> to vector<8x32xf32>
    %20 = arith.subf %3, %19 : vector<8x32xf32>
    %cst_11 = arith.constant 9.99999974E-6 : f32
    %21 = vector.broadcast %cst_11 : f32 to vector<8x1xf32>
    %22 = arith.addf %18, %21 : vector<8x1xf32>
    %23 = math.rsqrt %22 : vector<8x1xf32>
    %24 = vector.broadcast %23 : vector<8x1xf32> to vector<8x32xf32>
    %25 = arith.mulf %20, %24 : vector<8x32xf32>
    %26 = vector.broadcast %5 : vector<1x32xf32> to vector<8x32xf32>
    %27 = arith.mulf %25, %26 : vector<8x32xf32>
    %28 = vector.broadcast %7 : vector<1x32xf32> to vector<8x32xf32>
    %29 = arith.addf %27, %28 : vector<8x32xf32>
    %30 = arith.truncf %29 : vector<8x32xf32> to vector<8x32xbf16>
    %c0_12 = arith.constant 0 : index
    %c0_13 = arith.constant 0 : index
    %c0_14 = arith.constant 0 : index
    %31 = vector.load %arg5[%c0_12, %c0_13, %c0_14] : memref<1x32x96xbf16, #tpu.memory_space<vmem>>, vector<1x32x96xbf16>
    %32 = vector.shape_cast %31 : vector<1x32x96xbf16> to vector<32x96xbf16>
    %cst_15 = arith.constant dense<0.000000e+00> : vector<8x96xf32>
    %33 = tpu.matmul %30, %32, %cst_15 {dimension_numbers = #tpu.dot_dimension_numbers<[1], [0], [0], [1], [0, 0, 1, 1], [], []>} : vector<8x32xbf16>, vector<32x96xbf16>, vector<8x96xf32> -> vector<8x96xf32>
    %c0_16 = arith.constant 0 : index
    %c0_17 = arith.constant 0 : index
    %c0_18 = arith.constant 0 : index
    %34 = vector.load %arg6[%c0_16, %c0_17, %c0_18] : memref<1x1x96xf32, #tpu.memory_space<vmem>>, vector<1x1x96xf32>
    %35 = vector.shape_cast %34 : vector<1x1x96xf32> to vector<1x96xf32>
    %36 = vector.broadcast %35 : vector<1x96xf32> to vector<8x96xf32>
    %37 = arith.addf %33, %36 : vector<8x96xf32>
    %38 = tpu.transpose %37, [1, 0] : vector<8x96xf32> -> vector<96x8xf32>
    %39 = vector.extract_strided_slice %38 {offsets = [0, 0], sizes = [32, 8], strides = [1, 1]} : vector<96x8xf32> to vector<32x8xf32>
    %40 = vector.shape_cast %39 : vector<32x8xf32> to vector<4x8x8xf32>
    %41 = vector.extract_strided_slice %38 {offsets = [32, 0], sizes = [32, 8], strides = [1, 1]} : vector<96x8xf32> to vector<32x8xf32>
    %42 = vector.shape_cast %41 : vector<32x8xf32> to vector<4x8x8xf32>
    %43 = vector.extract_strided_slice %38 {offsets = [64, 0], sizes = [32, 8], strides = [1, 1]} : vector<96x8xf32> to vector<32x8xf32>
    %44 = vector.shape_cast %43 : vector<32x8xf32> to vector<4x8x8xf32>
    %45 = tpu.transpose %40, [0, 2, 1] : vector<4x8x8xf32> -> vector<4x8x8xf32>
    %46 = arith.truncf %45 : vector<4x8x8xf32> to vector<4x8x8xbf16>
    %47 = arith.truncf %42 : vector<4x8x8xf32> to vector<4x8x8xbf16>
    "tpu.trace_start"() <{level = 10 : i32, message = "hqd,hdk->hqk"}> : () -> ()
    %cst_19 = arith.constant dense<0.000000e+00> : vector<4x8x8xf32>
    %48 = tpu.matmul %46, %47, %cst_19 {dimension_numbers = #tpu.dot_dimension_numbers<[2], [1], [1], [2], [0, 0, 0, 1, 1, 2], [0], [0]>} : vector<4x8x8xbf16>, vector<4x8x8xbf16>, vector<4x8x8xf32> -> vector<4x8x8xf32>
    "tpu.trace_stop"() : () -> ()
    %cst_20 = arith.constant dense<0xFF800000> : vector<4x8xf32>
    %49 = vector.multi_reduction <maximumf>, %48, %cst_20 [2] : vector<4x8x8xf32> to vector<4x8xf32>
    %50 = vector.shape_cast %49 : vector<4x8xf32> to vector<4x8x1xf32>
    %51 = vector.broadcast %50 : vector<4x8x1xf32> to vector<4x8x8xf32>
    %52 = arith.subf %48, %51 : vector<4x8x8xf32>
    %53 = math.exp %52 : vector<4x8x8xf32>
    %cst_21 = arith.constant dense<0.000000e+00> : vector<4x8xf32>
    %54 = vector.multi_reduction <add>, %53, %cst_21 [2] : vector<4x8x8xf32> to vector<4x8xf32>
    %55 = tpu.reciprocal %54 {approx = true} : vector<4x8xf32> -> vector<4x8xf32>
    %56 = arith.truncf %44 : vector<4x8x8xf32> to vector<4x8x8xbf16>
    %57 = arith.truncf %53 : vector<4x8x8xf32> to vector<4x8x8xbf16>
    "tpu.trace_start"() <{level = 10 : i32, message = "hdk,hqk->hdq"}> : () -> ()
    %cst_22 = arith.constant dense<0.000000e+00> : vector<4x8x8xf32>
    %58 = tpu.matmul %56, %57, %cst_22 {dimension_numbers = #tpu.dot_dimension_numbers<[2], [2], [1], [1], [0, 0, 0, 1, 1, 1], [0], [0]>} : vector<4x8x8xbf16>, vector<4x8x8xbf16>, vector<4x8x8xf32> -> vector<4x8x8xf32>
    "tpu.trace_stop"() : () -> ()
    %59 = vector.shape_cast %55 : vector<4x8xf32> to vector<4x1x8xf32>
    %60 = vector.broadcast %59 : vector<4x1x8xf32> to vector<4x8x8xf32>
    %61 = arith.mulf %58, %60 : vector<4x8x8xf32>
    %62 = vector.shape_cast %61 : vector<4x8x8xf32> to vector<32x8xf32>
    %63 = tpu.transpose %62, [1, 0] : vector<32x8xf32> -> vector<8x32xf32>
    %64 = arith.truncf %63 : vector<8x32xf32> to vector<8x32xbf16>
    %c0_23 = arith.constant 0 : index
    %c0_24 = arith.constant 0 : index
    %c0_25 = arith.constant 0 : index
    %65 = vector.load %arg7[%c0_23, %c0_24, %c0_25] : memref<1x32x32xbf16, #tpu.memory_space<vmem>>, vector<1x32x32xbf16>
    %66 = vector.shape_cast %65 : vector<1x32x32xbf16> to vector<32x32xbf16>
    %cst_26 = arith.constant dense<0.000000e+00> : vector<8x32xf32>
    %67 = tpu.matmul %64, %66, %cst_26 {dimension_numbers = #tpu.dot_dimension_numbers<[1], [0], [0], [1], [0, 0, 1, 1], [], []>} : vector<8x32xbf16>, vector<32x32xbf16>, vector<8x32xf32> -> vector<8x32xf32>
    %c0_27 = arith.constant 0 : index
    %c0_28 = arith.constant 0 : index
    %c0_29 = arith.constant 0 : index
    %68 = vector.load %arg8[%c0_27, %c0_28, %c0_29] : memref<1x1x32xf32, #tpu.memory_space<vmem>>, vector<1x1x32xf32>
    %69 = vector.shape_cast %68 : vector<1x1x32xf32> to vector<1x32xf32>
    %70 = vector.broadcast %69 : vector<1x32xf32> to vector<8x32xf32>
    %71 = arith.addf %67, %70 : vector<8x32xf32>
    %72 = arith.addf %3, %71 : vector<8x32xf32>
    %c0_30 = arith.constant 0 : index
    %c0_31 = arith.constant 0 : index
    %c0_32 = arith.constant 0 : index
    %73 = vector.load %arg9[%c0_30, %c0_31, %c0_32] : memref<1x1x32xf32, #tpu.memory_space<vmem>>, vector<1x1x32xf32>
    %74 = vector.shape_cast %73 : vector<1x1x32xf32> to vector<1x32xf32>
    %c0_33 = arith.constant 0 : index
    %c0_34 = arith.constant 0 : index
    %c0_35 = arith.constant 0 : index
    %75 = vector.load %arg10[%c0_33, %c0_34, %c0_35] : memref<1x1x32xf32, #tpu.memory_space<vmem>>, vector<1x1x32xf32>
    %76 = vector.shape_cast %75 : vector<1x1x32xf32> to vector<1x32xf32>
    %cst_36 = arith.constant dense<0.000000e+00> : vector<8xf32>
    %77 = vector.multi_reduction <add>, %72, %cst_36 [1] : vector<8x32xf32> to vector<8xf32>
    %78 = vector.shape_cast %77 : vector<8xf32> to vector<8x1xf32>
    %cst_37 = arith.constant 3.200000e+01 : f32
    %79 = vector.broadcast %cst_37 : f32 to vector<8x1xf32>
    %80 = arith.divf %78, %79 : vector<8x1xf32>
    %81 = vector.broadcast %80 : vector<8x1xf32> to vector<8x32xf32>
    %82 = arith.subf %72, %81 : vector<8x32xf32>
    %83 = arith.mulf %82, %82 : vector<8x32xf32>
    %cst_38 = arith.constant dense<0.000000e+00> : vector<8xf32>
    %84 = vector.multi_reduction <add>, %83, %cst_38 [1] : vector<8x32xf32> to vector<8xf32>
    %85 = vector.shape_cast %84 : vector<8xf32> to vector<8x1xf32>
    %cst_39 = arith.constant 3.200000e+01 : f32
    %86 = vector.broadcast %cst_39 : f32 to vector<8x1xf32>
    %87 = arith.divf %85, %86 : vector<8x1xf32>
    %88 = vector.broadcast %80 : vector<8x1xf32> to vector<8x32xf32>
    %89 = arith.subf %72, %88 : vector<8x32xf32>
    %cst_40 = arith.constant 9.99999974E-6 : f32
    %90 = vector.broadcast %cst_40 : f32 to vector<8x1xf32>
    %91 = arith.addf %87, %90 : vector<8x1xf32>
    %92 = math.rsqrt %91 : vector<8x1xf32>
    %93 = vector.broadcast %92 : vector<8x1xf32> to vector<8x32xf32>
    %94 = arith.mulf %89, %93 : vector<8x32xf32>
    %95 = vector.broadcast %74 : vector<1x32xf32> to vector<8x32xf32>
    %96 = arith.mulf %94, %95 : vector<8x32xf32>
    %97 = vector.broadcast %76 : vector<1x32xf32> to vector<8x32xf32>
    %98 = arith.addf %96, %97 : vector<8x32xf32>
    %99 = arith.truncf %98 : vector<8x32xf32> to vector<8x32xbf16>
    %c0_41 = arith.constant 0 : index
    %c0_42 = arith.constant 0 : index
    %c0_43 = arith.constant 0 : index
    %100 = vector.load %arg11[%c0_41, %c0_42, %c0_43] : memref<1x32x128xbf16, #tpu.memory_space<vmem>>, vector<1x32x128xbf16>
    %101 = vector.shape_cast %100 : vector<1x32x128xbf16> to vector<32x128xbf16>
    %cst_44 = arith.constant dense<0.000000e+00> : vector<8x128xf32>
    %102 = tpu.matmul %99, %101, %cst_44 {dimension_numbers = #tpu.dot_dimension_numbers<[1], [0], [0], [1], [0, 0, 1, 1], [], []>} : vector<8x32xbf16>, vector<32x128xbf16>, vector<8x128xf32> -> vector<8x128xf32>
    %c0_45 = arith.constant 0 : index
    %c0_46 = arith.constant 0 : index
    %c0_47 = arith.constant 0 : index
    %103 = vector.load %arg12[%c0_45, %c0_46, %c0_47] : memref<1x1x128xf32, #tpu.memory_space<vmem>>, vector<1x1x128xf32>
    %104 = vector.shape_cast %103 : vector<1x1x128xf32> to vector<1x128xf32>
    %105 = vector.broadcast %104 : vector<1x128xf32> to vector<8x128xf32>
    %106 = arith.addf %102, %105 : vector<8x128xf32>
    %cst_48 = arith.constant 5.000000e-01 : f32
    %107 = vector.broadcast %cst_48 : f32 to vector<8x128xf32>
    %108 = arith.mulf %107, %106 : vector<8x128xf32>
    %cst_49 = arith.constant 0.707106769 : f32
    %109 = vector.broadcast %cst_49 : f32 to vector<8x128xf32>
    %110 = arith.mulf %106, %109 : vector<8x128xf32>
    %111 = math.erf %110 : vector<8x128xf32>
    %cst_50 = arith.constant 1.000000e+00 : f32
    %112 = vector.broadcast %cst_50 : f32 to vector<8x128xf32>
    %113 = arith.addf %112, %111 : vector<8x128xf32>
    %114 = arith.mulf %108, %113 : vector<8x128xf32>
    %115 = arith.truncf %114 : vector<8x128xf32> to vector<8x128xbf16>
    %c0_51 = arith.constant 0 : index
    %c0_52 = arith.constant 0 : index
    %c0_53 = arith.constant 0 : index
    %116 = vector.load %arg13[%c0_51, %c0_52, %c0_53] : memref<1x128x32xbf16, #tpu.memory_space<vmem>>, vector<1x128x32xbf16>
    %117 = vector.shape_cast %116 : vector<1x128x32xbf16> to vector<128x32xbf16>
    %cst_54 = arith.constant dense<0.000000e+00> : vector<8x32xf32>
    %118 = tpu.matmul %115, %117, %cst_54 {dimension_numbers = #tpu.dot_dimension_numbers<[1], [0], [0], [1], [0, 0, 1, 1], [], []>} : vector<8x128xbf16>, vector<128x32xbf16>, vector<8x32xf32> -> vector<8x32xf32>
    %c0_55 = arith.constant 0 : index
    %c0_56 = arith.constant 0 : index
    %c0_57 = arith.constant 0 : index
    %119 = vector.load %arg14[%c0_55, %c0_56, %c0_57] : memref<1x1x32xf32, #tpu.memory_space<vmem>>, vector<1x1x32xf32>
    %120 = vector.shape_cast %119 : vector<1x1x32xf32> to vector<1x32xf32>
    %121 = vector.broadcast %120 : vector<1x32xf32> to vector<8x32xf32>
    %122 = arith.addf %118, %121 : vector<8x32xf32>
    %123 = arith.addf %72, %122 : vector<8x32xf32>
    %c0_58 = arith.constant 0 : index
    %c0_59 = arith.constant 0 : index
    %124 = vector.load %arg16[%c0_58, %c0_59] : memref<8x32xf32, #tpu.memory_space<vmem>>, vector<8x32xf32>
    tpu.vector_store %arg16[%c0_58, %c0_59], %123 {strides = array<i32>} : memref<8x32xf32, #tpu.memory_space<vmem>>, vector<8x32xf32>,
    %c1_i32 = arith.constant 1 : i32
    %125 = arith.cmpi eq, %arg1, %c1_i32 : i32
    %126 = arith.extui %125 : i1 to i32
    %c0_i32_60 = arith.constant 0 : i32
    %127 = arith.cmpi ne, %126, %c0_i32_60 : i32
    scf.if %127 {
      %c0_61 = arith.constant 0 : index
      %c0_62 = arith.constant 0 : index
      %c0_63 = arith.constant 0 : index
      %128 = vector.load %arg15[%c0_61, %c0_62, %c0_63] : memref<1x8x32xf32, #tpu.memory_space<vmem>>, vector<1x8x32xf32>
      %129 = vector.shape_cast %128 : vector<1x8x32xf32> to vector<8x32xf32>
      %130 = vector.shape_cast %123 : vector<8x32xf32> to vector<1x8x32xf32>
      tpu.vector_store %arg15[%c0_61, %c0_62, %c0_63], %130 {strides = array<i32>} : memref<1x8x32xf32, #tpu.memory_space<vmem>>, vector<1x8x32xf32>,
    } else {
    }
    return
  }
  func.func @transform_0(%arg0: i32, %arg1: i32) -> (i32, i32, i32) {
    %c0_i32 = arith.constant 0 : i32
    %c0_i32_0 = arith.constant 0 : i32
    %c0_i32_1 = arith.constant 0 : i32
    return %arg0, %c0_i32, %c0_i32_0 : i32, i32, i32
  }
  func.func @transform_1(%arg0: i32, %arg1: i32) -> (i32, i32, i32) {
    %c0_i32 = arith.constant 0 : i32
    %c0_i32_0 = arith.constant 0 : i32
    %c0_i32_1 = arith.constant 0 : i32
    return %arg1, %c0_i32, %c0_i32_0 : i32, i32, i32
  }
  func.func @transform_2(%arg0: i32, %arg1: i32) -> (i32, i32, i32) {
    %c0_i32 = arith.constant 0 : i32
    %c0_i32_0 = arith.constant 0 : i32
    %c0_i32_1 = arith.constant 0 : i32
    return %arg1, %c0_i32, %c0_i32_0 : i32, i32, i32
  }
  func.func @transform_3(%arg0: i32, %arg1: i32) -> (i32, i32, i32) {
    %c0_i32 = arith.constant 0 : i32
    %c0_i32_0 = arith.constant 0 : i32
    %c0_i32_1 = arith.constant 0 : i32
    return %arg1, %c0_i32, %c0_i32_0 : i32, i32, i32
  }
  func.func @transform_4(%arg0: i32, %arg1: i32) -> (i32, i32, i32) {
    %c0_i32 = arith.constant 0 : i32
    %c0_i32_0 = arith.constant 0 : i32
    %c0_i32_1 = arith.constant 0 : i32
    return %arg1, %c0_i32, %c0_i32_0 : i32, i32, i32
  }
  func.func @transform_5(%arg0: i32, %arg1: i32) -> (i32, i32, i32) {
    %c0_i32 = arith.constant 0 : i32
    %c0_i32_0 = arith.constant 0 : i32
    %c0_i32_1 = arith.constant 0 : i32
    return %arg1, %c0_i32, %c0_i32_0 : i32, i32, i32
  }
  func.func @transform_6(%arg0: i32, %arg1: i32) -> (i32, i32, i32) {
    %c0_i32 = arith.constant 0 : i32
    %c0_i32_0 = arith.constant 0 : i32
    %c0_i32_1 = arith.constant 0 : i32
    return %arg1, %c0_i32, %c0_i32_0 : i32, i32, i32
  }
  func.func @transform_7(%arg0: i32, %arg1: i32) -> (i32, i32, i32) {
    %c0_i32 = arith.constant 0 : i32
    %c0_i32_0 = arith.constant 0 : i32
    %c0_i32_1 = arith.constant 0 : i32
    return %arg1, %c0_i32, %c0_i32_0 : i32, i32, i32
  }
  func.func @transform_8(%arg0: i32, %arg1: i32) -> (i32, i32, i32) {
    %c0_i32 = arith.constant 0 : i32
    %c0_i32_0 = arith.constant 0 : i32
    %c0_i32_1 = arith.constant 0 : i32
    return %arg1, %c0_i32, %c0_i32_0 : i32, i32, i32
  }
  func.func @transform_9(%arg0: i32, %arg1: i32) -> (i32, i32, i32) {
    %c0_i32 = arith.constant 0 : i32
    %c0_i32_0 = arith.constant 0 : i32
    %c0_i32_1 = arith.constant 0 : i32
    return %arg1, %c0_i32, %c0_i32_0 : i32, i32, i32
  }
  func.func @transform_10(%arg0: i32, %arg1: i32) -> (i32, i32, i32) {
    %c0_i32 = arith.constant 0 : i32
    %c0_i32_0 = arith.constant 0 : i32
    %c0_i32_1 = arith.constant 0 : i32
    return %arg1, %c0_i32, %c0_i32_0 : i32, i32, i32
  }
  func.func @transform_11(%arg0: i32, %arg1: i32) -> (i32, i32, i32) {
    %c0_i32 = arith.constant 0 : i32
    %c0_i32_0 = arith.constant 0 : i32
    %c0_i32_1 = arith.constant 0 : i32
    return %arg1, %c0_i32, %c0_i32_0 : i32, i32, i32
  }
  func.func @transform_12(%arg0: i32, %arg1: i32) -> (i32, i32, i32) {
    %c0_i32 = arith.constant 0 : i32
    %c0_i32_0 = arith.constant 0 : i32
    %c0_i32_1 = arith.constant 0 : i32
    return %arg1, %c0_i32, %c0_i32_0 : i32, i32, i32
  }
  func.func @transform_13(%arg0: i32, %arg1: i32) -> (i32, i32, i32) {
    %c0_i32 = arith.constant 0 : i32
    %c0_i32_0 = arith.constant 0 : i32
    %c0_i32_1 = arith.constant 0 : i32
    return %arg0, %c0_i32, %c0_i32_0 : i32, i32, i32
  }
}

</mosaic_0001>

<llo_original>
// kernel: transformer_forward.1
$region0: #{transformer_forward.1}
  #allocation0 [shape = 'u32[]', space=smem, size = 0x4, offset = 0x4, fixed_abs, tag = 'smem constant byte address 0x4 - core index']
  #allocation1 [shape = 'u32[144,128]{1,0:T(1,128)}', space=vmem, size = 0x12000, scoped, tag = 'internal scratch']
  #allocation2 [shape = 'f32[8,32]{1,0:T(8,128)}', space=vmem, size = 0x1000, scoped, tag = 'scratch operand']
  %s0 = inlined_call_operand.vmem [shape: f32[2,8,32], index: 0, kind: input, shape index: {}]
  %s1 = inlined_call_operand.vmem [shape: f32[2,1,32], index: 1, kind: input, shape index: {}]
  %s2 = inlined_call_operand.vmem [shape: f32[2,1,32], index: 2, kind: input, shape index: {}]
  %s3 = inlined_call_operand.vmem [shape: bf16[2,32,96], index: 3, kind: input, shape index: {}]
  %s4 = inlined_call_operand.vmem [shape: f32[2,1,96], index: 4, kind: input, shape index: {}]
  %s5 = inlined_call_operand.vmem [shape: bf16[2,32,32], index: 5, kind: input, shape index: {}]
  %s6 = inlined_call_operand.vmem [shape: f32[2,1,32], index: 6, kind: input, shape index: {}]
  %s7 = inlined_call_operand.vmem [shape: f32[2,1,32], index: 7, kind: input, shape index: {}]
  %s8 = inlined_call_operand.vmem [shape: f32[2,1,32], index: 8, kind: input, shape index: {}]
  %s9 = inlined_call_operand.vmem [shape: bf16[2,32,128], index: 9, kind: input, shape index: {}]
  %s10 = inlined_call_operand.vmem [shape: f32[2,1,128], index: 10, kind: input, shape index: {}]
  %s11 = inlined_call_operand.vmem [shape: bf16[2,128,32], index: 11, kind: input, shape index: {}]
  %s12 = inlined_call_operand.vmem [shape: f32[2,1,32], index: 12, kind: input, shape index: {}]
  %s13 = inlined_call_operand.vmem [shape: f32[2,8,32], index: 13, kind: output, shape index: {}]
  %s14 = sld [smem:[#allocation0]]
  $region93: #{transformer_forward.1} parent=0
    _
  %s16 = ssub.s32 1, %s14
  %s17 = scalar_select 0, %s16, %s14
  loop: start=0, step=1, limit=6
  $region2: #{transformer_forward.1} parent=0 // loop_pre_header
    _
  $region3: #{transformer_forward.1} parent=0 // loop_header
    %s19 = sphi 0, %s23
    %p20 = scmp.ge.s32.totalorder %s19, 6
    %s26 = sphi 0, %s38
    %s27 = sphi 0, %s34
    %s28 = sphi 0, %s26
    %s29 = sphi 0, %s27
    %s30 = sphi 0, %s28
    %s31 = sphi 0, %s29
    %s41 = sphi 0, %s43
    %s44 = sphi 0, %s41
    %s45 = sphi 0, %s44
    %s61 = sphi 0, %s45
    %s67 = sphi 0, %s69
    %s70 = sphi 0, %s67
    %s71 = sphi 0, %s70
    %s87 = sphi 0, %s71
    %s93 = sphi 0, %s95
    %s96 = sphi 0, %s93
    %s97 = sphi 0, %s96
    %s113 = sphi 0, %s97
    %s119 = sphi 0, %s121
    %s122 = sphi 0, %s119
    %s123 = sphi 0, %s122
    %s139 = sphi 0, %s123
    %s145 = sphi 0, %s147
    %s148 = sphi 0, %s145
    %s149 = sphi 0, %s148
    %s165 = sphi 0, %s149
    %s171 = sphi 0, %s173
    %s174 = sphi 0, %s171
    %s175 = sphi 0, %s174
    %s191 = sphi 0, %s175
    %s197 = sphi 0, %s199
    %s200 = sphi 0, %s197
    %s201 = sphi 0, %s200
    %s217 = sphi 0, %s201
    %s223 = sphi 0, %s225
    %s226 = sphi 0, %s223
    %s227 = sphi 0, %s226
    %s243 = sphi 0, %s227
    %s249 = sphi 0, %s251
    %s252 = sphi 0, %s249
    %s253 = sphi 0, %s252
    %s269 = sphi 0, %s253
    %s275 = sphi 0, %s277
    %s278 = sphi 0, %s275
    %s279 = sphi 0, %s278
    %s295 = sphi 0, %s279
    %s301 = sphi 0, %s303
    %s304 = sphi 0, %s301
    %s305 = sphi 0, %s304
    %s321 = sphi 0, %s305
    %s327 = sphi 0, %s329
    %s330 = sphi 0, %s327
    %s331 = sphi 0, %s330
    %s347 = sphi 0, %s331
    %s353 = sphi 0, %s355
    %s356 = sphi 0, %s353
    %s357 = sphi 0, %s356
    %s373 = sphi 0, %s357
    %s379 = sphi 0, %s381
    %s382 = sphi 0, %s379
    %s383 = sphi 0, %s382
    %s399 = sphi 0, %s383
  $region4: #{transformer_forward.1} parent=0 // loop_header_branch
    %22 = sbr.rel (%p20) target = $region8
  $region5: #{transformer_forward.1} parent=0 // loop_body
    %s24 = ssub.s32 %s19, 1
    %s25 = ssub.s32 %s19, 2
    %s32 = sadd.s32 1, %s27
    %p33 = scmp.ge.s32.totalorder %s32, 2
    %s34 = scalar_select %p33, 0, %s32
    %s35 = sadd.s32 1, %s26
    %s36 = scalar_select %p33, %s35, %s26
    %p37 = scmp.ge.s32.totalorder %s36, 2
    %s38 = scalar_select %p37, 0, %s36
    %s39 = ssub.s32 %s26, %s38
    %p40 = scmp.eq.s32.totalorder %s39, 0
    %s42 = sadd.s32 %s41, 1
    %s43 = scalar_select %p40, %s41, %s42
    %p46 = pneg %p40
    %p47 = scmp.eq.s32.totalorder %s19, 3
    %p48 = por %p46, %p47
    %p49 = scmp.ne.s32.totalorder %s41, %s44
    %p50 = scmp.eq.s32.totalorder %s19, 0
    %p51 = por %p49, %p50
    %p52 = scmp.ne.s32.totalorder %s41, %s44
    %p53 = scmp.eq.s32.totalorder %s24, 3
    %p54 = por %p52, %p53
    %p55 = scmp.ne.s32.totalorder %s44, %s45
    %p56 = scmp.eq.s32.totalorder %s24, 0
    %p57 = por %p55, %p56
    %p58 = scmp.ne.s32.totalorder %s44, %s45
    %p59 = scmp.eq.s32.totalorder %s25, 3
    %p60 = por %p58, %p59
    %p62 = scmp.ne.s32.totalorder %s45, %s61
    %p63 = scmp.eq.s32.totalorder %s25, 0
    %p64 = por %p62, %p63
    %s65 = ssub.s32 %s27, %s34
    %p66 = scmp.eq.s32.totalorder %s65, 0
    %s68 = sadd.s32 %s67, 1
    %s69 = scalar_select %p66, %s67, %s68
    %p72 = pneg %p66
    %p73 = scmp.eq.s32.totalorder %s19, 3
    %p74 = por %p72, %p73
    %p75 = scmp.ne.s32.totalorder %s67, %s70
    %p76 = scmp.eq.s32.totalorder %s19, 0
    %p77 = por %p75, %p76
    %p78 = scmp.ne.s32.totalorder %s67, %s70
    %p79 = scmp.eq.s32.totalorder %s24, 3
    %p80 = por %p78, %p79
    %p81 = scmp.ne.s32.totalorder %s70, %s71
    %p82 = scmp.eq.s32.totalorder %s24, 0
    %p83 = por %p81, %p82
    %p84 = scmp.ne.s32.totalorder %s70, %s71
    %p85 = scmp.eq.s32.totalorder %s25, 3
    %p86 = por %p84, %p85
    %p88 = scmp.ne.s32.totalorder %s71, %s87
    %p89 = scmp.eq.s32.totalorder %s25, 0
    %p90 = por %p88, %p89
    %s91 = ssub.s32 %s27, %s34
    %p92 = scmp.eq.s32.totalorder %s91, 0
    %s94 = sadd.s32 %s93, 1
    %s95 = scalar_select %p92, %s93, %s94
    %p98 = pneg %p92
    %p99 = scmp.eq.s32.totalorder %s19, 3
    %p100 = por %p98, %p99
    %p101 = scmp.ne.s32.totalorder %s93, %s96
    %p102 = scmp.eq.s32.totalorder %s19, 0
    %p103 = por %p101, %p102
    %p104 = scmp.ne.s32.totalorder %s93, %s96
    %p105 = scmp.eq.s32.totalorder %s24, 3
    %p106 = por %p104, %p105
    %p107 = scmp.ne.s32.totalorder %s96, %s97
    %p108 = scmp.eq.s32.totalorder %s24, 0
    %p109 = por %p107, %p108
    %p110 = scmp.ne.s32.totalorder %s96, %s97
    %p111 = scmp.eq.s32.totalorder %s25, 3
    %p112 = por %p110, %p111
    %p114 = scmp.ne.s32.totalorder %s97, %s113
    %p115 = scmp.eq.s32.totalorder %s25, 0
    %p116 = por %p114, %p115
    %s117 = ssub.s32 %s27, %s34
    %p118 = scmp.eq.s32.totalorder %s117, 0
    %s120 = sadd.s32 %s119, 1
    %s121 = scalar_select %p118, %s119, %s120
    %p124 = pneg %p118
    %p125 = scmp.eq.s32.totalorder %s19, 3
    %p126 = por %p124, %p125
    %p127 = scmp.ne.s32.totalorder %s119, %s122
    %p128 = scmp.eq.s32.totalorder %s19, 0
    %p129 = por %p127, %p128
    %p130 = scmp.ne.s32.totalorder %s119, %s122
    %p131 = scmp.eq.s32.totalorder %s24, 3
    %p132 = por %p130, %p131
    %p133 = scmp.ne.s32.totalorder %s122, %s123
    %p134 = scmp.eq.s32.totalorder %s24, 0
    %p135 = por %p133, %p134
    %p136 = scmp.ne.s32.totalorder %s122, %s123
    %p137 = scmp.eq.s32.totalorder %s25, 3
    %p138 = por %p136, %p137
    %p140 = scmp.ne.s32.totalorder %s123, %s139
    %p141 = scmp.eq.s32.totalorder %s25, 0
    %p142 = por %p140, %p141
    %s143 = ssub.s32 %s27, %s34
    %p144 = scmp.eq.s32.totalorder %s143, 0
    %s146 = sadd.s32 %s145, 1
    %s147 = scalar_select %p144, %s145, %s146
    %p150 = pneg %p144
    %p151 = scmp.eq.s32.totalorder %s19, 3
    %p152 = por %p150, %p151
    %p153 = scmp.ne.s32.totalorder %s145, %s148
    %p154 = scmp.eq.s32.totalorder %s19, 0
    %p155 = por %p153, %p154
    %p156 = scmp.ne.s32.totalorder %s145, %s148
    %p157 = scmp.eq.s32.totalorder %s24, 3
    %p158 = por %p156, %p157
    %p159 = scmp.ne.s32.totalorder %s148, %s149
    %p160 = scmp.eq.s32.totalorder %s24, 0
    %p161 = por %p159, %p160
    %p162 = scmp.ne.s32.totalorder %s148, %s149
    %p163 = scmp.eq.s32.totalorder %s25, 3
    %p164 = por %p162, %p163
    %p166 = scmp.ne.s32.totalorder %s149, %s165
    %p167 = scmp.eq.s32.totalorder %s25, 0
    %p168 = por %p166, %p167
    %s169 = ssub.s32 %s27, %s34
    %p170 = scmp.eq.s32.totalorder %s169, 0
    %s172 = sadd.s32 %s171, 1
    %s173 = scalar_select %p170, %s171, %s172
    %p176 = pneg %p170
    %p177 = scmp.eq.s32.totalorder %s19, 3
    %p178 = por %p176, %p177
    %p179 = scmp.ne.s32.totalorder %s171, %s174
    %p180 = scmp.eq.s32.totalorder %s19, 0
    %p181 = por %p179, %p180
    %p182 = scmp.ne.s32.totalorder %s171, %s174
    %p183 = scmp.eq.s32.totalorder %s24, 3
    %p184 = por %p182, %p183
    %p185 = scmp.ne.s32.totalorder %s174, %s175
    %p186 = scmp.eq.s32.totalorder %s24, 0
    %p187 = por %p185, %p186
    %p188 = scmp.ne.s32.totalorder %s174, %s175
    %p189 = scmp.eq.s32.totalorder %s25, 3
    %p190 = por %p188, %p189
    %p192 = scmp.ne.s32.totalorder %s175, %s191
    %p193 = scmp.eq.s32.totalorder %s25, 0
    %p194 = por %p192, %p193
    %s195 = ssub.s32 %s27, %s34
    %p196 = scmp.eq.s32.totalorder %s195, 0
    %s198 = sadd.s32 %s197, 1
    %s199 = scalar_select %p196, %s197, %s198
    %p202 = pneg %p196
    %p203 = scmp.eq.s32.totalorder %s19, 3
    %p204 = por %p202, %p203
    %p205 = scmp.ne.s32.totalorder %s197, %s200
    %p206 = scmp.eq.s32.totalorder %s19, 0
    %p207 = por %p205, %p206
    %p208 = scmp.ne.s32.totalorder %s197, %s200
    %p209 = scmp.eq.s32.totalorder %s24, 3
    %p210 = por %p208, %p209
    %p211 = scmp.ne.s32.totalorder %s200, %s201
    %p212 = scmp.eq.s32.totalorder %s24, 0
    %p213 = por %p211, %p212
    %p214 = scmp.ne.s32.totalorder %s200, %s201
    %p215 = scmp.eq.s32.totalorder %s25, 3
    %p216 = por %p214, %p215
    %p218 = scmp.ne.s32.totalorder %s201, %s217
    %p219 = scmp.eq.s32.totalorder %s25, 0
    %p220 = por %p218, %p219
    %s221 = ssub.s32 %s27, %s34
    %p222 = scmp.eq.s32.totalorder %s221, 0
    %s224 = sadd.s32 %s223, 1
    %s225 = scalar_select %p222, %s223, %s224
    %p228 = pneg %p222
    %p229 = scmp.eq.s32.totalorder %s19, 3
    %p230 = por %p228, %p229
    %p231 = scmp.ne.s32.totalorder %s223, %s226
    %p232 = scmp.eq.s32.totalorder %s19, 0
    %p233 = por %p231, %p232
    %p234 = scmp.ne.s32.totalorder %s223, %s226
    %p235 = scmp.eq.s32.totalorder %s24, 3
    %p236 = por %p234, %p235
    %p237 = scmp.ne.s32.totalorder %s226, %s227
    %p238 = scmp.eq.s32.totalorder %s24, 0
    %p239 = por %p237, %p238
    %p240 = scmp.ne.s32.totalorder %s226, %s227
    %p241 = scmp.eq.s32.totalorder %s25, 3
    %p242 = por %p240, %p241
    %p244 = scmp.ne.s32.totalorder %s227, %s243
    %p245 = scmp.eq.s32.totalorder %s25, 0
    %p246 = por %p244, %p245
    %s247 = ssub.s32 %s27, %s34
    %p248 = scmp.eq.s32.totalorder %s247, 0
    %s250 = sadd.s32 %s249, 1
    %s251 = scalar_select %p248, %s249, %s250
    %p254 = pneg %p248
    %p255 = scmp.eq.s32.totalorder %s19, 3
    %p256 = por %p254, %p255
    %p257 = scmp.ne.s32.totalorder %s249, %s252
    %p258 = scmp.eq.s32.totalorder %s19, 0
    %p259 = por %p257, %p258
    %p260 = scmp.ne.s32.totalorder %s249, %s252
    %p261 = scmp.eq.s32.totalorder %s24, 3
    %p262 = por %p260, %p261
    %p263 = scmp.ne.s32.totalorder %s252, %s253
    %p264 = scmp.eq.s32.totalorder %s24, 0
    %p265 = por %p263, %p264
    %p266 = scmp.ne.s32.totalorder %s252, %s253
    %p267 = scmp.eq.s32.totalorder %s25, 3
    %p268 = por %p266, %p267
    %p270 = scmp.ne.s32.totalorder %s253, %s269
    %p271 = scmp.eq.s32.totalorder %s25, 0
    %p272 = por %p270, %p271
    %s273 = ssub.s32 %s27, %s34
    %p274 = scmp.eq.s32.totalorder %s273, 0
    %s276 = sadd.s32 %s275, 1
    %s277 = scalar_select %p274, %s275, %s276
    %p280 = pneg %p274
    %p281 = scmp.eq.s32.totalorder %s19, 3
    %p282 = por %p280, %p281
    %p283 = scmp.ne.s32.totalorder %s275, %s278
    %p284 = scmp.eq.s32.totalorder %s19, 0
    %p285 = por %p283, %p284
    %p286 = scmp.ne.s32.totalorder %s275, %s278
    %p287 = scmp.eq.s32.totalorder %s24, 3
    %p288 = por %p286, %p287
    %p289 = scmp.ne.s32.totalorder %s278, %s279
    %p290 = scmp.eq.s32.totalorder %s24, 0
    %p291 = por %p289, %p290
    %p292 = scmp.ne.s32.totalorder %s278, %s279
    %p293 = scmp.eq.s32.totalorder %s25, 3
    %p294 = por %p292, %p293
    %p296 = scmp.ne.s32.totalorder %s279, %s295
    %p297 = scmp.eq.s32.totalorder %s25, 0
    %p298 = por %p296, %p297
    %s299 = ssub.s32 %s27, %s34
    %p300 = scmp.eq.s32.totalorder %s299, 0
    %s302 = sadd.s32 %s301, 1
    %s303 = scalar_select %p300, %s301, %s302
    %p306 = pneg %p300
    %p307 = scmp.eq.s32.totalorder %s19, 3
    %p308 = por %p306, %p307
    %p309 = scmp.ne.s32.totalorder %s301, %s304
    %p310 = scmp.eq.s32.totalorder %s19, 0
    %p311 = por %p309, %p310
    %p312 = scmp.ne.s32.totalorder %s301, %s304
    %p313 = scmp.eq.s32.totalorder %s24, 3
    %p314 = por %p312, %p313
    %p315 = scmp.ne.s32.totalorder %s304, %s305
    %p316 = scmp.eq.s32.totalorder %s24, 0
    %p317 = por %p315, %p316
    %p318 = scmp.ne.s32.totalorder %s304, %s305
    %p319 = scmp.eq.s32.totalorder %s25, 3
    %p320 = por %p318, %p319
    %p322 = scmp.ne.s32.totalorder %s305, %s321
    %p323 = scmp.eq.s32.totalorder %s25, 0
    %p324 = por %p322, %p323
    %s325 = ssub.s32 %s27, %s34
    %p326 = scmp.eq.s32.totalorder %s325, 0
    %s328 = sadd.s32 %s327, 1
    %s329 = scalar_select %p326, %s327, %s328
    %p332 = pneg %p326
    %p333 = scmp.eq.s32.totalorder %s19, 3
    %p334 = por %p332, %p333
    %p335 = scmp.ne.s32.totalorder %s327, %s330
    %p336 = scmp.eq.s32.totalorder %s19, 0
    %p337 = por %p335, %p336
    %p338 = scmp.ne.s32.totalorder %s327, %s330
    %p339 = scmp.eq.s32.totalorder %s24, 3
    %p340 = por %p338, %p339
    %p341 = scmp.ne.s32.totalorder %s330, %s331
    %p342 = scmp.eq.s32.totalorder %s24, 0
    %p343 = por %p341, %p342
    %p344 = scmp.ne.s32.totalorder %s330, %s331
    %p345 = scmp.eq.s32.totalorder %s25, 3
    %p346 = por %p344, %p345
    %p348 = scmp.ne.s32.totalorder %s331, %s347
    %p349 = scmp.eq.s32.totalorder %s25, 0
    %p350 = por %p348, %p349
    %s351 = ssub.s32 %s27, %s34
    %p352 = scmp.eq.s32.totalorder %s351, 0
    %s354 = sadd.s32 %s353, 1
    %s355 = scalar_select %p352, %s353, %s354
    %p358 = pneg %p352
    %p359 = scmp.eq.s32.totalorder %s19, 3
    %p360 = por %p358, %p359
    %p361 = scmp.ne.s32.totalorder %s353, %s356
    %p362 = scmp.eq.s32.totalorder %s19, 0
    %p363 = por %p361, %p362
    %p364 = scmp.ne.s32.totalorder %s353, %s356
    %p365 = scmp.eq.s32.totalorder %s24, 3
    %p366 = por %p364, %p365
    %p367 = scmp.ne.s32.totalorder %s356, %s357
    %p368 = scmp.eq.s32.totalorder %s24, 0
    %p369 = por %p367, %p368
    %p370 = scmp.ne.s32.totalorder %s356, %s357
    %p371 = scmp.eq.s32.totalorder %s25, 3
    %p372 = por %p370, %p371
    %p374 = scmp.ne.s32.totalorder %s357, %s373
    %p375 = scmp.eq.s32.totalorder %s25, 0
    %p376 = por %p374, %p375
    %s377 = ssub.s32 %s26, %s38
    %p378 = scmp.eq.s32.totalorder %s377, 0
    %s380 = sadd.s32 %s379, 1
    %s381 = scalar_select %p378, %s379, %s380
    %p384 = pneg %p378
    %p385 = scmp.eq.s32.totalorder %s19, 3
    %p386 = por %p384, %p385
    %p387 = scmp.ne.s32.totalorder %s379, %s382
    %p388 = scmp.eq.s32.totalorder %s19, 0
    %p389 = por %p387, %p388
    %p390 = scmp.ne.s32.totalorder %s379, %s382
    %p391 = scmp.eq.s32.totalorder %s24, 3
    %p392 = por %p390, %p391
    %p393 = scmp.ne.s32.totalorder %s382, %s383
    %p394 = scmp.eq.s32.totalorder %s24, 0
    %p395 = por %p393, %p394
    %p396 = scmp.ne.s32.totalorder %s382, %s383
    %p397 = scmp.eq.s32.totalorder %s25, 3
    %p398 = por %p396, %p397
    %p400 = scmp.ne.s32.totalorder %s383, %s399
    %p401 = scmp.eq.s32.totalorder %s25, 0
    %p402 = por %p400, %p401
    %p403 = scmp.le.s32.totalorder 1, %s19
    %p404 = scmp.lt.s32.totalorder %s19, 5
    %p405 = pnand %p403, %p404
    %p406 = pneg %p405
    // Predicated region
    $region9: #{transformer_forward.1} parent=5 // pred_check
      _
    $region10: #{transformer_forward.1} parent=5 // pred_check_branch
      %408 = sbr.rel (%p405) target = $region12
    $region11: #{transformer_forward.1} parent=5 // pred_region
      %s409 = ssub.s32 %s19, 1
    $region12: #{transformer_forward.1} parent=5 // pred_fallthru
      _
    %p410 = scmp.lt.s32.totalorder %s19, 4
    // Predicated region
    $region13: #{transformer_forward.1} parent=5 // pred_check
      %p411 = pneg %p410
    $region14: #{transformer_forward.1} parent=5 // pred_check_branch
      %413 = sbr.rel (%p411) target = $region16
    $region15: #{transformer_forward.1} parent=5 // pred_region
      // Predicated region
      $region17: #{transformer_forward.1} parent=15 // pred_check
        %p414 = pneg %p51
      $region18: #{transformer_forward.1} parent=15 // pred_check_branch
        %416 = sbr.rel (%p414) target = $region20
      $region19: #{transformer_forward.1} parent=15 // pred_region
        %p417 = scmp.lt.s32.totalorder %s26, 1
        %s418 = scalar_select %p417, %s26, 1
        %s419 = smul.addr %s418, 8
        %s420 = scalar_lea.vmem %s0, %s419
      $region20: #{transformer_forward.1} parent=15 // pred_fallthru
        _
      // Predicated region
      $region21: #{transformer_forward.1} parent=15 // pred_check
        %p421 = pneg %p77
      $region22: #{transformer_forward.1} parent=15 // pred_check_branch
        %423 = sbr.rel (%p421) target = $region24
      $region23: #{transformer_forward.1} parent=15 // pred_region
        %p424 = scmp.lt.s32.totalorder %s27, 1
        %s425 = scalar_select %p424, %s27, 1
        %s426 = scalar_lea.vmem %s1, %s425
      $region24: #{transformer_forward.1} parent=15 // pred_fallthru
        _
      // Predicated region
      $region25: #{transformer_forward.1} parent=15 // pred_check
        %p427 = pneg %p103
      $region26: #{transformer_forward.1} parent=15 // pred_check_branch
        %429 = sbr.rel (%p427) target = $region28
      $region27: #{transformer_forward.1} parent=15 // pred_region
        %p430 = scmp.lt.s32.totalorder %s27, 1
        %s431 = scalar_select %p430, %s27, 1
        %s432 = scalar_lea.vmem %s2, %s431
      $region28: #{transformer_forward.1} parent=15 // pred_fallthru
        _
      // Predicated region
      $region29: #{transformer_forward.1} parent=15 // pred_check
        %p433 = pneg %p129
      $region30: #{transformer_forward.1} parent=15 // pred_check_branch
        %435 = sbr.rel (%p433) target = $region32
      $region31: #{transformer_forward.1} parent=15 // pred_region
        %p436 = scmp.lt.s32.totalorder %s27, 1
        %s437 = scalar_select %p436, %s27, 1
        %s438 = smul.addr %s437, 4
        %s439 = smul.addr %s438, 4
        %s440 = scalar_lea.vmem %s3, %s439
      $region32: #{transformer_forward.1} parent=15 // pred_fallthru
        _
      // Predicated region
      $region33: #{transformer_forward.1} parent=15 // pred_check
        %p441 = pneg %p155
      $region34: #{transformer_forward.1} parent=15 // pred_check_branch
        %443 = sbr.rel (%p441) target = $region36
      $region35: #{transformer_forward.1} parent=15 // pred_region
        %p444 = scmp.lt.s32.totalorder %s27, 1
        %s445 = scalar_select %p444, %s27, 1
        %s446 = scalar_lea.vmem %s4, %s445
      $region36: #{transformer_forward.1} parent=15 // pred_fallthru
        _
      // Predicated region
      $region37: #{transformer_forward.1} parent=15 // pred_check
        %p447 = pneg %p181
      $region38: #{transformer_forward.1} parent=15 // pred_check_branch
        %449 = sbr.rel (%p447) target = $region40
      $region39: #{transformer_forward.1} parent=15 // pred_region
        %p450 = scmp.lt.s32.totalorder %s27, 1
        %s451 = scalar_select %p450, %s27, 1
        %s452 = smul.addr %s451, 4
        %s453 = smul.addr %s452, 4
        %s454 = scalar_lea.vmem %s5, %s453
      $region40: #{transformer_forward.1} parent=15 // pred_fallthru
        _
      // Predicated region
      $region41: #{transformer_forward.1} parent=15 // pred_check
        %p455 = pneg %p207
      $region42: #{transformer_forward.1} parent=15 // pred_check_branch
        %457 = sbr.rel (%p455) target = $region44
      $region43: #{transformer_forward.1} parent=15 // pred_region
        %p458 = scmp.lt.s32.totalorder %s27, 1
        %s459 = scalar_select %p458, %s27, 1
        %s460 = scalar_lea.vmem %s6, %s459
      $region44: #{transformer_forward.1} parent=15 // pred_fallthru
        _
      // Predicated region
      $region45: #{transformer_forward.1} parent=15 // pred_check
        %p461 = pneg %p233
      $region46: #{transformer_forward.1} parent=15 // pred_check_branch
        %463 = sbr.rel (%p461) target = $region48
      $region47: #{transformer_forward.1} parent=15 // pred_region
        %p464 = scmp.lt.s32.totalorder %s27, 1
        %s465 = scalar_select %p464, %s27, 1
        %s466 = scalar_lea.vmem %s7, %s465
      $region48: #{transformer_forward.1} parent=15 // pred_fallthru
        _
      // Predicated region
      $region49: #{transformer_forward.1} parent=15 // pred_check
        %p467 = pneg %p259
      $region50: #{transformer_forward.1} parent=15 // pred_check_branch
        %469 = sbr.rel (%p467) target = $region52
      $region51: #{transformer_forward.1} parent=15 // pred_region
        %p470 = scmp.lt.s32.totalorder %s27, 1
        %s471 = scalar_select %p470, %s27, 1
        %s472 = scalar_lea.vmem %s8, %s471
      $region52: #{transformer_forward.1} parent=15 // pred_fallthru
        _
      // Predicated region
      $region53: #{transformer_forward.1} parent=15 // pred_check
        %p473 = pneg %p285
      $region54: #{transformer_forward.1} parent=15 // pred_check_branch
        %475 = sbr.rel (%p473) target = $region56
      $region55: #{transformer_forward.1} parent=15 // pred_region
        %p476 = scmp.lt.s32.totalorder %s27, 1
        %s477 = scalar_select %p476, %s27, 1
        %s478 = smul.addr %s477, 4
        %s479 = smul.addr %s478, 4
        %s480 = scalar_lea.vmem %s9, %s479
      $region56: #{transformer_forward.1} parent=15 // pred_fallthru
        _
      // Predicated region
      $region57: #{transformer_forward.1} parent=15 // pred_check
        %p481 = pneg %p311
      $region58: #{transformer_forward.1} parent=15 // pred_check_branch
        %483 = sbr.rel (%p481) target = $region60
      $region59: #{transformer_forward.1} parent=15 // pred_region
        %p484 = scmp.lt.s32.totalorder %s27, 1
        %s485 = scalar_select %p484, %s27, 1
        %s486 = scalar_lea.vmem %s10, %s485
      $region60: #{transformer_forward.1} parent=15 // pred_fallthru
        _
      // Predicated region
      $region61: #{transformer_forward.1} parent=15 // pred_check
        %p487 = pneg %p337
      $region62: #{transformer_forward.1} parent=15 // pred_check_branch
        %489 = sbr.rel (%p487) target = $region64
      $region63: #{transformer_forward.1} parent=15 // pred_region
        %p490 = scmp.lt.s32.totalorder %s27, 1
        %s491 = scalar_select %p490, %s27, 1
        %s492 = smul.addr %s491, 16
        %s493 = smul.addr %s492, 4
        %s494 = scalar_lea.vmem %s11, %s493
      $region64: #{transformer_forward.1} parent=15 // pred_fallthru
        _
      // Predicated region
      $region65: #{transformer_forward.1} parent=15 // pred_check
        %p495 = pneg %p363
      $region66: #{transformer_forward.1} parent=15 // pred_check_branch
        %497 = sbr.rel (%p495) target = $region68
      $region67: #{transformer_forward.1} parent=15 // pred_region
        %p498 = scmp.lt.s32.totalorder %s27, 1
        %s499 = scalar_select %p498, %s27, 1
        %s500 = scalar_lea.vmem %s12, %s499
      $region68: #{transformer_forward.1} parent=15 // pred_fallthru
        _
    $region16: #{transformer_forward.1} parent=5 // pred_fallthru
      _
    %p501 = scmp.le.s32.totalorder 1, %s19
    %p502 = scmp.lt.s32.totalorder %s19, 5
    %p503 = pnand %p501, %p502
    %p504 = pneg %p503
    // Predicated region
    $region69: #{transformer_forward.1} parent=5 // pred_check
      _
    $region70: #{transformer_forward.1} parent=5 // pred_check_branch
      %506 = sbr.rel (%p503) target = $region72
    $region71: #{transformer_forward.1} parent=5 // pred_region
      %s507 = ssub.s32 %s19, 1
      %p508 = scmp.lt.s32.totalorder %s28, 1
      %s509 = scalar_select %p508, %s28, 1
      %s510 = smul.addr %s509, 8
      %s511 = scalar_lea.vmem %s0, %s510
      %p512 = pneg %p57
      %p513 = pneg %p54
      %p514 = scmp.lt.s32.totalorder %s29, 1
      %s515 = scalar_select %p514, %s29, 1
      %s516 = scalar_lea.vmem %s1, %s515
      %p517 = pneg %p83
      %p518 = pneg %p80
      %p519 = scmp.lt.s32.totalorder %s29, 1
      %s520 = scalar_select %p519, %s29, 1
      %s521 = scalar_lea.vmem %s2, %s520
      %p522 = pneg %p109
      %p523 = pneg %p106
      %p524 = scmp.lt.s32.totalorder %s29, 1
      %s525 = scalar_select %p524, %s29, 1
      %s526 = smul.addr %s525, 4
      %s527 = smul.addr %s526, 4
      %s528 = scalar_lea.vmem %s3, %s527
      %p529 = pneg %p135
      %p530 = pneg %p132
      %p531 = scmp.lt.s32.totalorder %s29, 1
      %s532 = scalar_select %p531, %s29, 1
      %s533 = scalar_lea.vmem %s4, %s532
      %p534 = pneg %p161
      %p535 = pneg %p158
      %p536 = scmp.lt.s32.totalorder %s29, 1
      %s537 = scalar_select %p536, %s29, 1
      %s538 = smul.addr %s537, 4
      %s539 = smul.addr %s538, 4
      %s540 = scalar_lea.vmem %s5, %s539
      %p541 = pneg %p187
      %p542 = pneg %p184
      %p543 = scmp.lt.s32.totalorder %s29, 1
      %s544 = scalar_select %p543, %s29, 1
      %s545 = scalar_lea.vmem %s6, %s544
      %p546 = pneg %p213
      %p547 = pneg %p210
      %p548 = scmp.lt.s32.totalorder %s29, 1
      %s549 = scalar_select %p548, %s29, 1
      %s550 = scalar_lea.vmem %s7, %s549
      %p551 = pneg %p239
      %p552 = pneg %p236
      %p553 = scmp.lt.s32.totalorder %s29, 1
      %s554 = scalar_select %p553, %s29, 1
      %s555 = scalar_lea.vmem %s8, %s554
      %p556 = pneg %p265
      %p557 = pneg %p262
      %p558 = scmp.lt.s32.totalorder %s29, 1
      %s559 = scalar_select %p558, %s29, 1
      %s560 = smul.addr %s559, 4
      %s561 = smul.addr %s560, 4
      %s562 = scalar_lea.vmem %s9, %s561
      %p563 = pneg %p291
      %p564 = pneg %p288
      %p565 = scmp.lt.s32.totalorder %s29, 1
      %s566 = scalar_select %p565, %s29, 1
      %s567 = scalar_lea.vmem %s10, %s566
      %p568 = pneg %p317
      %p569 = pneg %p314
      %p570 = scmp.lt.s32.totalorder %s29, 1
      %s571 = scalar_select %p570, %s29, 1
      %s572 = smul.addr %s571, 16
      %s573 = smul.addr %s572, 4
      %s574 = scalar_lea.vmem %s11, %s573
      %p575 = pneg %p343
      %p576 = pneg %p340
      %p577 = scmp.lt.s32.totalorder %s29, 1
      %s578 = scalar_select %p577, %s29, 1
      %s579 = scalar_lea.vmem %s12, %s578
      %p580 = pneg %p369
      %p581 = pneg %p366
      %p582 = pneg %p395
      %p583 = pneg %p392
      %p584 = scmp.lt.s32.totalorder %s28, 1
      %s585 = scalar_select %p584, %s28, 1
      %s586 = smul.addr %s585, 8
      %s587 = scalar_lea.vmem %s13, %s586
      %p588 = scmp.lt.s32.totalorder %s28, 1
      %s589 = scalar_select %p588, %s28, 1
      %s590 = smul.addr %s589, 8
      %s591 = scalar_lea.vmem %s0, %s590
      %p592 = scmp.lt.s32.totalorder %s29, 1
      %s593 = scalar_select %p592, %s29, 1
      %s594 = scalar_lea.vmem %s1, %s593
      %p595 = scmp.lt.s32.totalorder %s29, 1
      %s596 = scalar_select %p595, %s29, 1
      %s597 = scalar_lea.vmem %s2, %s596
      %p598 = scmp.lt.s32.totalorder %s29, 1
      %s599 = scalar_select %p598, %s29, 1
      %s600 = smul.addr %s599, 4
      %s601 = smul.addr %s600, 4
      %s602 = scalar_lea.vmem %s3, %s601
      %p603 = scmp.lt.s32.totalorder %s29, 1
      %s604 = scalar_select %p603, %s29, 1
      %s605 = scalar_lea.vmem %s4, %s604
      %p606 = scmp.lt.s32.totalorder %s29, 1
      %s607 = scalar_select %p606, %s29, 1
      %s608 = smul.addr %s607, 4
      %s609 = smul.addr %s608, 4
      %s610 = scalar_lea.vmem %s5, %s609
      %p611 = scmp.lt.s32.totalorder %s29, 1
      %s612 = scalar_select %p611, %s29, 1
      %s613 = scalar_lea.vmem %s6, %s612
      %p614 = scmp.lt.s32.totalorder %s29, 1
      %s615 = scalar_select %p614, %s29, 1
      %s616 = scalar_lea.vmem %s7, %s615
      %p617 = scmp.lt.s32.totalorder %s29, 1
      %s618 = scalar_select %p617, %s29, 1
      %s619 = scalar_lea.vmem %s8, %s618
      %p620 = scmp.lt.s32.totalorder %s29, 1
      %s621 = scalar_select %p620, %s29, 1
      %s622 = smul.addr %s621, 4
      %s623 = smul.addr %s622, 4
      %s624 = scalar_lea.vmem %s9, %s623
      %p625 = scmp.lt.s32.totalorder %s29, 1
      %s626 = scalar_select %p625, %s29, 1
      %s627 = scalar_lea.vmem %s10, %s626
      %p628 = scmp.lt.s32.totalorder %s29, 1
      %s629 = scalar_select %p628, %s29, 1
      %s630 = smul.addr %s629, 16
      %s631 = smul.addr %s630, 4
      %s632 = scalar_lea.vmem %s11, %s631
      %p633 = scmp.lt.s32.totalorder %s29, 1
      %s634 = scalar_select %p633, %s29, 1
      %s635 = scalar_lea.vmem %s12, %s634
      %p636 = scmp.lt.s32.totalorder %s28, 1
      %s637 = scalar_select %p636, %s28, 1
      %s638 = smul.addr %s637, 8
      %s639 = scalar_lea.vmem %s13, %s638
      %p641 = scmp.eq.s32.totalorder %s29, 0
      // Predicated region
      $region73: #{transformer_forward.1} parent=71 // pred_check
        %p642 = pneg %p641
      $region74: #{transformer_forward.1} parent=71 // pred_check_branch
        %644 = sbr.rel (%p642) target = $region76
      $region75: #{transformer_forward.1} parent=71 // pred_region
        %v645 = vld [vmem:[%s591] sm:$0xff]
        %vm646 = vcmask 261120
        %647 = vst.msk [vmem:[#allocation2] sm:$0xff] %vm646, %v645
      $region76: #{transformer_forward.1} parent=71 // pred_fallthru
        _
      %v648 = vld [vmem:[#allocation2] sm:$0xff]
      %v649 = vld [vmem:[%s594] sm:$0x1]
      %v650 = vld [vmem:[%s597] sm:$0x1]
      %vm651 = vcmask 261120
      %v652 = vsel %vm651, %v648, 0.0
      %653 = vadd.xlane.f32.xlu0 %v652
      %v654 = vpop.xlane.xlu0 %653
      %v655 = vrcp.pop 32.0
      %v656 = vmul.f32 %v654, %v655
      %v657 = vsub.f32 %v648, %v656
      %v658 = vmul.f32 %v657, %v657
      %v659 = vsel %vm651, %v658, 0.0
      %660 = vadd.xlane.f32.xlu0 %v659
      %v661 = vpop.xlane.xlu0 %660
      %v662 = vmul.f32 %v661, %v655
      %v663 = vadd.f32 %v662, 1e-05
      %v664 = vrsqrt.pop %v663
      %v665 = vmul.f32 %v657, %v664
      %v667 = vlaneseq
      %v668 = vshrl.u32 %v667, 7
      %v669 = vsub.s32 0, %v668
      %v670 = vrot.slane %v649, %v669
      %v672 = vmul.f32 %v665, %v670
      %v674 = vlaneseq
      %v675 = vshrl.u32 %v674, 7
      %v676 = vsub.s32 0, %v675
      %v677 = vrot.slane %v650, %v676
      %v679 = vadd.f32 %v672, %v677
      %v680 = vpack.c.bf16 %v679, %v679
      %v681 = vld [vmem:[%s602] sm:$0xf]
      %v682 = vld [vmem:[%s602 + $0x4] sm:$0xf]
      %v683 = vld [vmem:[%s602 + $0x8] sm:$0xf]
      %v684 = vld [vmem:[%s602 + $0xc] sm:$0xf]
      %v685 = vld [vmem:[%s605] sm:$0x1]
      %v687 = vlaneseq
      %v688 = vshrl.u32 %v687, 7
      %v689 = vsub.s32 0, %v688
      %v690 = vrot.slane %v685, %v689
      %v696 = vunpack.c.l.b16 %v681
      %v697 = vunpack.c.l.b16 %v682
      %v698 = vunpack.c.l.b16 %v683
      %v699 = vunpack.c.l.b16 %v684
      %v700 = vpack.c.b16 %v697, %v696
      %v701 = vpack.c.b16 %v699, %v698
      %v705 = vsel %vm651, %v680, 0
      %707 = vmatprep.subr.bf16.mxu0 0
      %708 = vmatpush1.bf16.msra.mxu0 %v700
      %709 = vmatprep.subr.bf16.mxu0 0
      %710 = vmatpush1.bf16.msra.mxu0 %v701
      %711 = vmatprep.subr.bf16.mxu0 0
      %712 = vmatpush1.bf16.msra.mxu0 0
      %713 = vmatprep.subr.bf16.mxu0 0
      %714 = vmatpush1.bf16.msra.mxu0 0
      %715 = vmatprep.subr.bf16.mxu0 0
      %716 = vmatpush1.bf16.msra.mxu0 0
      %717 = vmatprep.subr.bf16.mxu0 0
      %718 = vmatpush1.bf16.msra.mxu0 0
      %719 = vmatprep.subr.bf16.mxu0 0
      %720 = vmatpush1.bf16.msra.mxu0 0
      %721 = vmatprep.subr.bf16.mxu0 0
      %722 = vmatpush1.bf16.msra.mxu0 0
      %723 = vmatprep.subr.bf16.mxu0 0
      %724 = vmatpush1.bf16.msra.mxu0 0
      %725 = vmatprep.subr.bf16.mxu0 0
      %726 = vmatpush1.bf16.msra.mxu0 0
      %727 = vmatprep.subr.bf16.mxu0 0
      %728 = vmatpush1.bf16.msra.mxu0 0
      %729 = vmatprep.subr.bf16.mxu0 0
      %730 = vmatpush1.bf16.msra.mxu0 0
      %731 = vmatprep.subr.bf16.mxu0 0
      %732 = vmatpush1.bf16.msra.mxu0 0
      %733 = vmatprep.subr.bf16.mxu0 0
      %734 = vmatpush1.bf16.msra.mxu0 0
      %735 = vmatprep.subr.bf16.mxu0 0
      %736 = vmatpush1.bf16.msra.mxu0 0
      %737 = vmatprep.subr.bf16.mxu0 0
      %738 = vmatpush1.bf16.msra.mxu0 0
      %739 = vmatprep.mubr.bf16.mxu0 0
      %740 = vmatmul.mubr.bf16.gmra.mrb[0].mxu0 %v705
      %v741 = vpop.f32.mrb[0].mxu0
      %v742 = vadd.f32 %v690, %v741
      %v743 = vpop.f32.mrb[0].mxu0
      %v744 = vpop.f32.mrb[0].mxu0
      %v745 = vpop.f32.mrb[0].mxu0
      %746 = vdwg.mxu0
      %747 = vxpose.xlu0.b32.start [1/16] %v742, 128
      %748 = vxpose.xlu0.b32.cont [2/16] 0.0, 128
      %749 = vxpose.xlu0.b32.cont [3/16] 0.0, 128
      %750 = vxpose.xlu0.b32.cont [4/16] 0.0, 128
      %751 = vxpose.xlu0.b32.cont [5/16] 0.0, 128
      %752 = vxpose.xlu0.b32.cont [6/16] 0.0, 128
      %753 = vxpose.xlu0.b32.cont [7/16] 0.0, 128
      %754 = vxpose.xlu0.b32.cont [8/16] 0.0, 128
      %755 = vxpose.xlu0.b32.cont [9/16] 0.0, 128
      %756 = vxpose.xlu0.b32.cont [10/16] 0.0, 128
      %757 = vxpose.xlu0.b32.cont [11/16] 0.0, 128
      %758 = vxpose.xlu0.b32.cont [12/16] 0.0, 128
      %759 = vxpose.xlu0.b32.cont [13/16] 0.0, 128
      %760 = vxpose.xlu0.b32.cont [14/16] 0.0, 128
      %761 = vxpose.xlu0.b32.cont [15/16] 0.0, 128
      %762 = vxpose.xlu0.b32.end [16/16] 0.0, 128
      %v763 = vpop.trf.xlu0
      %v764 = vpop.trf.xlu0
      %v765 = vpop.trf.xlu0
      %v766 = vpop.trf.xlu0
      %v767 = vpop.trf.xlu0
      %v768 = vpop.trf.xlu0
      %v769 = vpop.trf.xlu0
      %v770 = vpop.trf.xlu0
      %v771 = vpop.trf.xlu0
      %v772 = vpop.trf.xlu0
      %v773 = vpop.trf.xlu0
      %v774 = vpop.trf.xlu0
      %v775 = vpop.trf.xlu0
      %v776 = vpop.trf.xlu0
      %v777 = vpop.trf.xlu0
      %v778 = vpop.trf.xlu0
      %779 = vxpose.xlu0.b32.start [1/16] %v763, 128
      %780 = vxpose.xlu0.b32.cont [2/16] 0.0, 128
      %781 = vxpose.xlu0.b32.cont [3/16] 0.0, 128
      %782 = vxpose.xlu0.b32.cont [4/16] 0.0, 128
      %783 = vxpose.xlu0.b32.cont [5/16] 0.0, 128
      %784 = vxpose.xlu0.b32.cont [6/16] 0.0, 128
      %785 = vxpose.xlu0.b32.cont [7/16] 0.0, 128
      %786 = vxpose.xlu0.b32.cont [8/16] 0.0, 128
      %787 = vxpose.xlu0.b32.cont [9/16] 0.0, 128
      %788 = vxpose.xlu0.b32.cont [10/16] 0.0, 128
      %789 = vxpose.xlu0.b32.cont [11/16] 0.0, 128
      %790 = vxpose.xlu0.b32.cont [12/16] 0.0, 128
      %791 = vxpose.xlu0.b32.cont [13/16] 0.0, 128
      %792 = vxpose.xlu0.b32.cont [14/16] 0.0, 128
      %793 = vxpose.xlu0.b32.cont [15/16] 0.0, 128
      %794 = vxpose.xlu0.b32.end [16/16] 0.0, 128
      %v795 = vpop.trf.xlu0
      %v796 = vpop.trf.xlu0
      %v797 = vpop.trf.xlu0
      %v798 = vpop.trf.xlu0
      %v799 = vpop.trf.xlu0
      %v800 = vpop.trf.xlu0
      %v801 = vpop.trf.xlu0
      %v802 = vpop.trf.xlu0
      %v803 = vpop.trf.xlu0
      %v804 = vpop.trf.xlu0
      %v805 = vpop.trf.xlu0
      %v806 = vpop.trf.xlu0
      %v807 = vpop.trf.xlu0
      %v808 = vpop.trf.xlu0
      %v809 = vpop.trf.xlu0
      %v810 = vpop.trf.xlu0
      %811 = vxpose.xlu0.b32.start [1/16] %v764, 128
      %812 = vxpose.xlu0.b32.cont [2/16] 0.0, 128
      %813 = vxpose.xlu0.b32.cont [3/16] 0.0, 128
      %814 = vxpose.xlu0.b32.cont [4/16] 0.0, 128
      %815 = vxpose.xlu0.b32.cont [5/16] 0.0, 128
      %816 = vxpose.xlu0.b32.cont [6/16] 0.0, 128
      %817 = vxpose.xlu0.b32.cont [7/16] 0.0, 128
      %818 = vxpose.xlu0.b32.cont [8/16] 0.0, 128
      %819 = vxpose.xlu0.b32.cont [9/16] 0.0, 128
      %820 = vxpose.xlu0.b32.cont [10/16] 0.0, 128
      %821 = vxpose.xlu0.b32.cont [11/16] 0.0, 128
      %822 = vxpose.xlu0.b32.cont [12/16] 0.0, 128
      %823 = vxpose.xlu0.b32.cont [13/16] 0.0, 128
      %824 = vxpose.xlu0.b32.cont [14/16] 0.0, 128
      %825 = vxpose.xlu0.b32.cont [15/16] 0.0, 128
      %826 = vxpose.xlu0.b32.end [16/16] 0.0, 128
      %v827 = vpop.trf.xlu0
      %v828 = vpop.trf.xlu0
      %v829 = vpop.trf.xlu0
      %v830 = vpop.trf.xlu0
      %v831 = vpop.trf.xlu0
      %v832 = vpop.trf.xlu0
      %v833 = vpop.trf.xlu0
      %v834 = vpop.trf.xlu0
      %v835 = vpop.trf.xlu0
      %v836 = vpop.trf.xlu0
      %v837 = vpop.trf.xlu0
      %v838 = vpop.trf.xlu0
      %v839 = vpop.trf.xlu0
      %v840 = vpop.trf.xlu0
      %v841 = vpop.trf.xlu0
      %v842 = vpop.trf.xlu0
      %843 = vxpose.xlu0.b32.start [1/16] %v765, 128
      %844 = vxpose.xlu0.b32.cont [2/16] 0.0, 128
      %845 = vxpose.xlu0.b32.cont [3/16] 0.0, 128
      %846 = vxpose.xlu0.b32.cont [4/16] 0.0, 128
      %847 = vxpose.xlu0.b32.cont [5/16] 0.0, 128
      %848 = vxpose.xlu0.b32.cont [6/16] 0.0, 128
      %849 = vxpose.xlu0.b32.cont [7/16] 0.0, 128
      %850 = vxpose.xlu0.b32.cont [8/16] 0.0, 128
      %851 = vxpose.xlu0.b32.cont [9/16] 0.0, 128
      %852 = vxpose.xlu0.b32.cont [10/16] 0.0, 128
      %853 = vxpose.xlu0.b32.cont [11/16] 0.0, 128
      %854 = vxpose.xlu0.b32.cont [12/16] 0.0, 128
      %855 = vxpose.xlu0.b32.cont [13/16] 0.0, 128
      %856 = vxpose.xlu0.b32.cont [14/16] 0.0, 128
      %857 = vxpose.xlu0.b32.cont [15/16] 0.0, 128
      %858 = vxpose.xlu0.b32.end [16/16] 0.0, 128
      %v859 = vpop.trf.xlu0
      %v860 = vpop.trf.xlu0
      %v861 = vpop.trf.xlu0
      %v862 = vpop.trf.xlu0
      %v863 = vpop.trf.xlu0
      %v864 = vpop.trf.xlu0
      %v865 = vpop.trf.xlu0
      %v866 = vpop.trf.xlu0
      %v867 = vpop.trf.xlu0
      %v868 = vpop.trf.xlu0
      %v869 = vpop.trf.xlu0
      %v870 = vpop.trf.xlu0
      %v871 = vpop.trf.xlu0
      %v872 = vpop.trf.xlu0
      %v873 = vpop.trf.xlu0
      %v874 = vpop.trf.xlu0
      %875 = vxpose.xlu0.b32.start [1/16] %v766, 128
      %876 = vxpose.xlu0.b32.cont [2/16] 0.0, 128
      %877 = vxpose.xlu0.b32.cont [3/16] 0.0, 128
      %878 = vxpose.xlu0.b32.cont [4/16] 0.0, 128
      %879 = vxpose.xlu0.b32.cont [5/16] 0.0, 128
      %880 = vxpose.xlu0.b32.cont [6/16] 0.0, 128
      %881 = vxpose.xlu0.b32.cont [7/16] 0.0, 128
      %882 = vxpose.xlu0.b32.cont [8/16] 0.0, 128
      %883 = vxpose.xlu0.b32.cont [9/16] 0.0, 128
      %884 = vxpose.xlu0.b32.cont [10/16] 0.0, 128
      %885 = vxpose.xlu0.b32.cont [11/16] 0.0, 128
      %886 = vxpose.xlu0.b32.cont [12/16] 0.0, 128
      %887 = vxpose.xlu0.b32.cont [13/16] 0.0, 128
      %888 = vxpose.xlu0.b32.cont [14/16] 0.0, 128
      %889 = vxpose.xlu0.b32.cont [15/16] 0.0, 128
      %890 = vxpose.xlu0.b32.end [16/16] 0.0, 128
      %v891 = vpop.trf.xlu0
      %v892 = vpop.trf.xlu0
      %v893 = vpop.trf.xlu0
      %v894 = vpop.trf.xlu0
      %v895 = vpop.trf.xlu0
      %v896 = vpop.trf.xlu0
      %v897 = vpop.trf.xlu0
      %v898 = vpop.trf.xlu0
      %v899 = vpop.trf.xlu0
      %v900 = vpop.trf.xlu0
      %v901 = vpop.trf.xlu0
      %v902 = vpop.trf.xlu0
      %v903 = vpop.trf.xlu0
      %v904 = vpop.trf.xlu0
      %v905 = vpop.trf.xlu0
      %v906 = vpop.trf.xlu0
      %v907 = vpack.c.bf16 %v795, %v795
      %v908 = vpack.c.bf16 %v827, %v827
      %v909 = vpack.c.bf16 %v859, %v859
      %v910 = vpack.c.bf16 %v891, %v891
      %v911 = vpack.c.bf16 %v767, %v767
      %v912 = vpack.c.bf16 %v768, %v768
      %v913 = vpack.c.bf16 %v769, %v769
      %v914 = vpack.c.bf16 %v770, %v770
      %vm915 = vcmask 64512
      %v917 = vsel %vm915, %v907, 0
      %vm919 = vcmask 1043456
      %v921 = vsel %vm919, %v911, 0
      %923 = vmatprep.subr.bf16.mxu0 0
      %924 = vmatpush1.bf16.msra.mxu0 %v921
      %925 = vmatprep.subr.bf16.mxu0 0
      %926 = vmatpush1.bf16.msra.mxu0 0
      %927 = vmatprep.subr.bf16.mxu0 0
      %928 = vmatpush1.bf16.msra.mxu0 0
      %929 = vmatprep.subr.bf16.mxu0 0
      %930 = vmatpush1.bf16.msra.mxu0 0
      %931 = vmatprep.subr.bf16.mxu0 0
      %932 = vmatpush1.bf16.msra.mxu0 0
      %933 = vmatprep.subr.bf16.mxu0 0
      %934 = vmatpush1.bf16.msra.mxu0 0
      %935 = vmatprep.subr.bf16.mxu0 0
      %936 = vmatpush1.bf16.msra.mxu0 0
      %937 = vmatprep.subr.bf16.mxu0 0
      %938 = vmatpush1.bf16.msra.mxu0 0
      %939 = vmatprep.subr.bf16.mxu0 0
      %940 = vmatpush1.bf16.msra.mxu0 0
      %941 = vmatprep.subr.bf16.mxu0 0
      %942 = vmatpush1.bf16.msra.mxu0 0
      %943 = vmatprep.subr.bf16.mxu0 0
      %944 = vmatpush1.bf16.msra.mxu0 0
      %945 = vmatprep.subr.bf16.mxu0 0
      %946 = vmatpush1.bf16.msra.mxu0 0
      %947 = vmatprep.subr.bf16.mxu0 0
      %948 = vmatpush1.bf16.msra.mxu0 0
      %949 = vmatprep.subr.bf16.mxu0 0
      %950 = vmatpush1.bf16.msra.mxu0 0
      %951 = vmatprep.subr.bf16.mxu0 0
      %952 = vmatpush1.bf16.msra.mxu0 0
      %953 = vmatprep.subr.bf16.mxu0 0
      %954 = vmatpush1.bf16.msra.mxu0 0
      %955 = vmatprep.mubr.bf16.mxu0 0
      %956 = vmatmul.mubr.bf16.gmra.mrb[0].mxu0 %v917
      %v957 = vpop.f32.mrb[0].mxu0
      %v958 = vadd.f32 0.0, %v957
      %v959 = vpop.f32.mrb[0].mxu0
      %v960 = vpop.f32.mrb[0].mxu0
      %v961 = vpop.f32.mrb[0].mxu0
      %962 = vdwg.mxu0
      %v964 = vsel %vm915, %v908, 0
      %v967 = vsel %vm919, %v912, 0
      %969 = vmatprep.subr.bf16.mxu0 0
      %970 = vmatpush1.bf16.msra.mxu0 %v967
      %971 = vmatprep.subr.bf16.mxu0 0
      %972 = vmatpush1.bf16.msra.mxu0 0
      %973 = vmatprep.subr.bf16.mxu0 0
      %974 = vmatpush1.bf16.msra.mxu0 0
      %975 = vmatprep.subr.bf16.mxu0 0
      %976 = vmatpush1.bf16.msra.mxu0 0
      %977 = vmatprep.subr.bf16.mxu0 0
      %978 = vmatpush1.bf16.msra.mxu0 0
      %979 = vmatprep.subr.bf16.mxu0 0
      %980 = vmatpush1.bf16.msra.mxu0 0
      %981 = vmatprep.subr.bf16.mxu0 0
      %982 = vmatpush1.bf16.msra.mxu0 0
      %983 = vmatprep.subr.bf16.mxu0 0
      %984 = vmatpush1.bf16.msra.mxu0 0
      %985 = vmatprep.subr.bf16.mxu0 0
      %986 = vmatpush1.bf16.msra.mxu0 0
      %987 = vmatprep.subr.bf16.mxu0 0
      %988 = vmatpush1.bf16.msra.mxu0 0
      %989 = vmatprep.subr.bf16.mxu0 0
      %990 = vmatpush1.bf16.msra.mxu0 0
      %991 = vmatprep.subr.bf16.mxu0 0
      %992 = vmatpush1.bf16.msra.mxu0 0
      %993 = vmatprep.subr.bf16.mxu0 0
      %994 = vmatpush1.bf16.msra.mxu0 0
      %995 = vmatprep.subr.bf16.mxu0 0
      %996 = vmatpush1.bf16.msra.mxu0 0
      %997 = vmatprep.subr.bf16.mxu0 0
      %998 = vmatpush1.bf16.msra.mxu0 0
      %999 = vmatprep.subr.bf16.mxu0 0
      %1000 = vmatpush1.bf16.msra.mxu0 0
      %1001 = vmatprep.mubr.bf16.mxu0 0
      %1002 = vmatmul.mubr.bf16.gmra.mrb[0].mxu0 %v964
      %v1003 = vpop.f32.mrb[0].mxu0
      %v1004 = vadd.f32 0.0, %v1003
      %v1005 = vpop.f32.mrb[0].mxu0
      %v1006 = vpop.f32.mrb[0].mxu0
      %v1007 = vpop.f32.mrb[0].mxu0
      %1008 = vdwg.mxu0
      %v1010 = vsel %vm915, %v909, 0
      %v1013 = vsel %vm919, %v913, 0
      %1015 = vmatprep.subr.bf16.mxu0 0
      %1016 = vmatpush1.bf16.msra.mxu0 %v1013
      %1017 = vmatprep.subr.bf16.mxu0 0
      %1018 = vmatpush1.bf16.msra.mxu0 0
      %1019 = vmatprep.subr.bf16.mxu0 0
      %1020 = vmatpush1.bf16.msra.mxu0 0
      %1021 = vmatprep.subr.bf16.mxu0 0
      %1022 = vmatpush1.bf16.msra.mxu0 0
      %1023 = vmatprep.subr.bf16.mxu0 0
      %1024 = vmatpush1.bf16.msra.mxu0 0
      %1025 = vmatprep.subr.bf16.mxu0 0
      %1026 = vmatpush1.bf16.msra.mxu0 0
      %1027 = vmatprep.subr.bf16.mxu0 0
      %1028 = vmatpush1.bf16.msra.mxu0 0
      %1029 = vmatprep.subr.bf16.mxu0 0
      %1030 = vmatpush1.bf16.msra.mxu0 0
      %1031 = vmatprep.subr.bf16.mxu0 0
      %1032 = vmatpush1.bf16.msra.mxu0 0
      %1033 = vmatprep.subr.bf16.mxu0 0
      %1034 = vmatpush1.bf16.msra.mxu0 0
      %1035 = vmatprep.subr.bf16.mxu0 0
      %1036 = vmatpush1.bf16.msra.mxu0 0
      %1037 = vmatprep.subr.bf16.mxu0 0
      %1038 = vmatpush1.bf16.msra.mxu0 0
      %1039 = vmatprep.subr.bf16.mxu0 0
      %1040 = vmatpush1.bf16.msra.mxu0 0
      %1041 = vmatprep.subr.bf16.mxu0 0
      %1042 = vmatpush1.bf16.msra.mxu0 0
      %1043 = vmatprep.subr.bf16.mxu0 0
      %1044 = vmatpush1.bf16.msra.mxu0 0
      %1045 = vmatprep.subr.bf16.mxu0 0
      %1046 = vmatpush1.bf16.msra.mxu0 0
      %1047 = vmatprep.mubr.bf16.mxu0 0
      %1048 = vmatmul.mubr.bf16.gmra.mrb[0].mxu0 %v1010
      %v1049 = vpop.f32.mrb[0].mxu0
      %v1050 = vadd.f32 0.0, %v1049
      %v1051 = vpop.f32.mrb[0].mxu0
      %v1052 = vpop.f32.mrb[0].mxu0
      %v1053 = vpop.f32.mrb[0].mxu0
      %1054 = vdwg.mxu0
      %v1056 = vsel %vm915, %v910, 0
      %v1059 = vsel %vm919, %v914, 0
      %1061 = vmatprep.subr.bf16.mxu0 0
      %1062 = vmatpush1.bf16.msra.mxu0 %v1059
      %1063 = vmatprep.subr.bf16.mxu0 0
      %1064 = vmatpush1.bf16.msra.mxu0 0
      %1065 = vmatprep.subr.bf16.mxu0 0
      %1066 = vmatpush1.bf16.msra.mxu0 0
      %1067 = vmatprep.subr.bf16.mxu0 0
      %1068 = vmatpush1.bf16.msra.mxu0 0
      %1069 = vmatprep.subr.bf16.mxu0 0
      %1070 = vmatpush1.bf16.msra.mxu0 0
      %1071 = vmatprep.subr.bf16.mxu0 0
      %1072 = vmatpush1.bf16.msra.mxu0 0
      %1073 = vmatprep.subr.bf16.mxu0 0
      %1074 = vmatpush1.bf16.msra.mxu0 0
      %1075 = vmatprep.subr.bf16.mxu0 0
      %1076 = vmatpush1.bf16.msra.mxu0 0
      %1077 = vmatprep.subr.bf16.mxu0 0
      %1078 = vmatpush1.bf16.msra.mxu0 0
      %1079 = vmatprep.subr.bf16.mxu0 0
      %1080 = vmatpush1.bf16.msra.mxu0 0
      %1081 = vmatprep.subr.bf16.mxu0 0
      %1082 = vmatpush1.bf16.msra.mxu0 0
      %1083 = vmatprep.subr.bf16.mxu0 0
      %1084 = vmatpush1.bf16.msra.mxu0 0
      %1085 = vmatprep.subr.bf16.mxu0 0
      %1086 = vmatpush1.bf16.msra.mxu0 0
      %1087 = vmatprep.subr.bf16.mxu0 0
      %1088 = vmatpush1.bf16.msra.mxu0 0
      %1089 = vmatprep.subr.bf16.mxu0 0
      %1090 = vmatpush1.bf16.msra.mxu0 0
      %1091 = vmatprep.subr.bf16.mxu0 0
      %1092 = vmatpush1.bf16.msra.mxu0 0
      %1093 = vmatprep.mubr.bf16.mxu0 0
      %1094 = vmatmul.mubr.bf16.gmra.mrb[0].mxu0 %v1056
      %v1095 = vpop.f32.mrb[0].mxu0
      %v1096 = vadd.f32 0.0, %v1095
      %v1097 = vpop.f32.mrb[0].mxu0
      %v1098 = vpop.f32.mrb[0].mxu0
      %v1099 = vpop.f32.mrb[0].mxu0
      %1100 = vdwg.mxu0
      %v1101 = vsel %vm915, %v958, -inf
      %1102 = vmax.xlane.f32.xlu0 %v1101
      %v1103 = vpop.xlane.xlu0 %1102
      %v1104 = vsel %vm915, %v1004, -inf
      %1105 = vmax.xlane.f32.xlu0 %v1104
      %v1106 = vpop.xlane.xlu0 %1105
      %v1107 = vsel %vm915, %v1050, -inf
      %1108 = vmax.xlane.f32.xlu0 %v1107
      %v1109 = vpop.xlane.xlu0 %1108
      %v1110 = vsel %vm915, %v1096, -inf
      %1111 = vmax.xlane.f32.xlu0 %v1110
      %v1112 = vpop.xlane.xlu0 %1111
      %v1113 = vsub.f32 %v958, %v1103
      %v1114 = vsub.f32 %v1004, %v1106
      %v1115 = vsub.f32 %v1050, %v1109
      %v1116 = vsub.f32 %v1096, %v1112
      %v1117 = vmul.f32 %v1113, 1.442695
      %v1118 = vpow.pop %v1117
      %v1119 = vmul.f32 %v1114, 1.442695
      %v1120 = vpow.pop %v1119
      %v1121 = vmul.f32 %v1115, 1.442695
      %v1122 = vpow.pop %v1121
      %v1123 = vmul.f32 %v1116, 1.442695
      %v1124 = vpow.pop %v1123
      %v1125 = vsel %vm915, %v1118, 0.0
      %1126 = vadd.xlane.f32.xlu0 %v1125
      %v1127 = vpop.xlane.xlu0 %1126
      %v1128 = vsel %vm915, %v1120, 0.0
      %1129 = vadd.xlane.f32.xlu0 %v1128
      %v1130 = vpop.xlane.xlu0 %1129
      %v1131 = vsel %vm915, %v1122, 0.0
      %1132 = vadd.xlane.f32.xlu0 %v1131
      %v1133 = vpop.xlane.xlu0 %1132
      %v1134 = vsel %vm915, %v1124, 0.0
      %1135 = vadd.xlane.f32.xlu0 %v1134
      %v1136 = vpop.xlane.xlu0 %1135
      %v1137 = vrcp.pop %v1127
      %v1138 = vrcp.pop %v1130
      %v1139 = vrcp.pop %v1133
      %v1140 = vrcp.pop %v1136
      %v1141 = vpack.c.bf16 %v771, %v771
      %v1142 = vpack.c.bf16 %v772, %v772
      %v1143 = vpack.c.bf16 %v773, %v773
      %v1144 = vpack.c.bf16 %v774, %v774
      %v1145 = vpack.c.bf16 %v1118, %v1118
      %v1146 = vpack.c.bf16 %v1120, %v1120
      %v1147 = vpack.c.bf16 %v1122, %v1122
      %v1148 = vpack.c.bf16 %v1124, %v1124
      %v1150 = vsel %vm915, %v1141, 0
      %v1153 = vsel %vm915, %v1145, 0
      %1155 = vmatprep.subr.bf16.mxu0 0
      %1156 = vmatpush1.bf16.xpose.msra.mxu0 %v1153
      %1157 = vmatprep.subr.bf16.mxu0 0
      %1158 = vmatpush1.bf16.xpose.msra.mxu0 0
      %1159 = vmatprep.subr.bf16.mxu0 0
      %1160 = vmatpush1.bf16.xpose.msra.mxu0 0
      %1161 = vmatprep.subr.bf16.mxu0 0
      %1162 = vmatpush1.bf16.xpose.msra.mxu0 0
      %1163 = vmatprep.subr.bf16.mxu0 0
      %1164 = vmatpush1.bf16.xpose.msra.mxu0 0
      %1165 = vmatprep.subr.bf16.mxu0 0
      %1166 = vmatpush1.bf16.xpose.msra.mxu0 0
      %1167 = vmatprep.subr.bf16.mxu0 0
      %1168 = vmatpush1.bf16.xpose.msra.mxu0 0
      %1169 = vmatprep.subr.bf16.mxu0 0
      %1170 = vmatpush1.bf16.xpose.msra.mxu0 0
      %1171 = vmatprep.subr.bf16.mxu0 0
      %1172 = vmatpush1.bf16.xpose.msra.mxu0 0
      %1173 = vmatprep.subr.bf16.mxu0 0
      %1174 = vmatpush1.bf16.xpose.msra.mxu0 0
      %1175 = vmatprep.subr.bf16.mxu0 0
      %1176 = vmatpush1.bf16.xpose.msra.mxu0 0
      %1177 = vmatprep.subr.bf16.mxu0 0
      %1178 = vmatpush1.bf16.xpose.msra.mxu0 0
      %1179 = vmatprep.subr.bf16.mxu0 0
      %1180 = vmatpush1.bf16.xpose.msra.mxu0 0
      %1181 = vmatprep.subr.bf16.mxu0 0
      %1182 = vmatpush1.bf16.xpose.msra.mxu0 0
      %1183 = vmatprep.subr.bf16.mxu0 0
      %1184 = vmatpush1.bf16.xpose.msra.mxu0 0
      %1185 = vmatprep.subr.bf16.mxu0 0
      %1186 = vmatpush1.bf16.xpose.msra.mxu0 0
      %1187 = vmatprep.mubr.bf16.mxu0 0
      %1188 = vmatmul.mubr.bf16.gmra.mrb[0].mxu0 %v1150
      %v1189 = vpop.f32.mrb[0].mxu0
      %v1190 = vadd.f32 0.0, %v1189
      %v1191 = vpop.f32.mrb[0].mxu0
      %v1192 = vpop.f32.mrb[0].mxu0
      %v1193 = vpop.f32.mrb[0].mxu0
      %1194 = vdwg.mxu0
      %v1196 = vsel %vm915, %v1142, 0
      %v1199 = vsel %vm915, %v1146, 0
      %1201 = vmatprep.subr.bf16.mxu0 0
      %1202 = vmatpush1.bf16.xpose.msra.mxu0 %v1199
      %1203 = vmatprep.subr.bf16.mxu0 0
      %1204 = vmatpush1.bf16.xpose.msra.mxu0 0
      %1205 = vmatprep.subr.bf16.mxu0 0
      %1206 = vmatpush1.bf16.xpose.msra.mxu0 0
      %1207 = vmatprep.subr.bf16.mxu0 0
      %1208 = vmatpush1.bf16.xpose.msra.mxu0 0
      %1209 = vmatprep.subr.bf16.mxu0 0
      %1210 = vmatpush1.bf16.xpose.msra.mxu0 0
      %1211 = vmatprep.subr.bf16.mxu0 0
      %1212 = vmatpush1.bf16.xpose.msra.mxu0 0
      %1213 = vmatprep.subr.bf16.mxu0 0
      %1214 = vmatpush1.bf16.xpose.msra.mxu0 0
      %1215 = vmatprep.subr.bf16.mxu0 0
      %1216 = vmatpush1.bf16.xpose.msra.mxu0 0
      %1217 = vmatprep.subr.bf16.mxu0 0
      %1218 = vmatpush1.bf16.xpose.msra.mxu0 0
      %1219 = vmatprep.subr.bf16.mxu0 0
      %1220 = vmatpush1.bf16.xpose.msra.mxu0 0
      %1221 = vmatprep.subr.bf16.mxu0 0
      %1222 = vmatpush1.bf16.xpose.msra.mxu0 0
      %1223 = vmatprep.subr.bf16.mxu0 0
      %1224 = vmatpush1.bf16.xpose.msra.mxu0 0
      %1225 = vmatprep.subr.bf16.mxu0 0
      %1226 = vmatpush1.bf16.xpose.msra.mxu0 0
      %1227 = vmatprep.subr.bf16.mxu0 0
      %1228 = vmatpush1.bf16.xpose.msra.mxu0 0
      %1229 = vmatprep.subr.bf16.mxu0 0
      %1230 = vmatpush1.bf16.xpose.msra.mxu0 0
      %1231 = vmatprep.subr.bf16.mxu0 0
      %1232 = vmatpush1.bf16.xpose.msra.mxu0 0
      %1233 = vmatprep.mubr.bf16.mxu0 0
      %1234 = vmatmul.mubr.bf16.gmra.mrb[0].mxu0 %v1196
      %v1235 = vpop.f32.mrb[0].mxu0
      %v1236 = vadd.f32 0.0, %v1235
      %v1237 = vpop.f32.mrb[0].mxu0
      %v1238 = vpop.f32.mrb[0].mxu0
      %v1239 = vpop.f32.mrb[0].mxu0
      %1240 = vdwg.mxu0
      %v1242 = vsel %vm915, %v1143, 0
      %v1245 = vsel %vm915, %v1147, 0
      %1247 = vmatprep.subr.bf16.mxu0 0
      %1248 = vmatpush1.bf16.xpose.msra.mxu0 %v1245
      %1249 = vmatprep.subr.bf16.mxu0 0
      %1250 = vmatpush1.bf16.xpose.msra.mxu0 0
      %1251 = vmatprep.subr.bf16.mxu0 0
      %1252 = vmatpush1.bf16.xpose.msra.mxu0 0
      %1253 = vmatprep.subr.bf16.mxu0 0
      %1254 = vmatpush1.bf16.xpose.msra.mxu0 0
      %1255 = vmatprep.subr.bf16.mxu0 0
      %1256 = vmatpush1.bf16.xpose.msra.mxu0 0
      %1257 = vmatprep.subr.bf16.mxu0 0
      %1258 = vmatpush1.bf16.xpose.msra.mxu0 0
      %1259 = vmatprep.subr.bf16.mxu0 0
      %1260 = vmatpush1.bf16.xpose.msra.mxu0 0
      %1261 = vmatprep.subr.bf16.mxu0 0
      %1262 = vmatpush1.bf16.xpose.msra.mxu0 0
      %1263 = vmatprep.subr.bf16.mxu0 0
      %1264 = vmatpush1.bf16.xpose.msra.mxu0 0
      %1265 = vmatprep.subr.bf16.mxu0 0
      %1266 = vmatpush1.bf16.xpose.msra.mxu0 0
      %1267 = vmatprep.subr.bf16.mxu0 0
      %1268 = vmatpush1.bf16.xpose.msra.mxu0 0
      %1269 = vmatprep.subr.bf16.mxu0 0
      %1270 = vmatpush1.bf16.xpose.msra.mxu0 0
      %1271 = vmatprep.subr.bf16.mxu0 0
      %1272 = vmatpush1.bf16.xpose.msra.mxu0 0
      %1273 = vmatprep.subr.bf16.mxu0 0
      %1274 = vmatpush1.bf16.xpose.msra.mxu0 0
      %1275 = vmatprep.subr.bf16.mxu0 0
      %1276 = vmatpush1.bf16.xpose.msra.mxu0 0
      %1277 = vmatprep.subr.bf16.mxu0 0
      %1278 = vmatpush1.bf16.xpose.msra.mxu0 0
      %1279 = vmatprep.mubr.bf16.mxu0 0
      %1280 = vmatmul.mubr.bf16.gmra.mrb[0].mxu0 %v1242
      %v1281 = vpop.f32.mrb[0].mxu0
      %v1282 = vadd.f32 0.0, %v1281
      %v1283 = vpop.f32.mrb[0].mxu0
      %v1284 = vpop.f32.mrb[0].mxu0
      %v1285 = vpop.f32.mrb[0].mxu0
      %1286 = vdwg.mxu0
      %v1288 = vsel %vm915, %v1144, 0
      %v1291 = vsel %vm915, %v1148, 0
      %1293 = vmatprep.subr.bf16.mxu0 0
      %1294 = vmatpush1.bf16.xpose.msra.mxu0 %v1291
      %1295 = vmatprep.subr.bf16.mxu0 0
      %1296 = vmatpush1.bf16.xpose.msra.mxu0 0
      %1297 = vmatprep.subr.bf16.mxu0 0
      %1298 = vmatpush1.bf16.xpose.msra.mxu0 0
      %1299 = vmatprep.subr.bf16.mxu0 0
      %1300 = vmatpush1.bf16.xpose.msra.mxu0 0
      %1301 = vmatprep.subr.bf16.mxu0 0
      %1302 = vmatpush1.bf16.xpose.msra.mxu0 0
      %1303 = vmatprep.subr.bf16.mxu0 0
      %1304 = vmatpush1.bf16.xpose.msra.mxu0 0
      %1305 = vmatprep.subr.bf16.mxu0 0
      %1306 = vmatpush1.bf16.xpose.msra.mxu0 0
      %1307 = vmatprep.subr.bf16.mxu0 0
      %1308 = vmatpush1.bf16.xpose.msra.mxu0 0
      %1309 = vmatprep.subr.bf16.mxu0 0
      %1310 = vmatpush1.bf16.xpose.msra.mxu0 0
      %1311 = vmatprep.subr.bf16.mxu0 0
      %1312 = vmatpush1.bf16.xpose.msra.mxu0 0
      %1313 = vmatprep.subr.bf16.mxu0 0
      %1314 = vmatpush1.bf16.xpose.msra.mxu0 0
      %1315 = vmatprep.subr.bf16.mxu0 0
      %1316 = vmatpush1.bf16.xpose.msra.mxu0 0
      %1317 = vmatprep.subr.bf16.mxu0 0
      %1318 = vmatpush1.bf16.xpose.msra.mxu0 0
      %1319 = vmatprep.subr.bf16.mxu0 0
      %1320 = vmatpush1.bf16.xpose.msra.mxu0 0
      %1321 = vmatprep.subr.bf16.mxu0 0
      %1322 = vmatpush1.bf16.xpose.msra.mxu0 0
      %1323 = vmatprep.subr.bf16.mxu0 0
      %1324 = vmatpush1.bf16.xpose.msra.mxu0 0
      %1325 = vmatprep.mubr.bf16.mxu0 0
      %1326 = vmatmul.mubr.bf16.gmra.mrb[0].mxu0 %v1288
      %v1327 = vpop.f32.mrb[0].mxu0
      %v1328 = vadd.f32 0.0, %v1327
      %v1329 = vpop.f32.mrb[0].mxu0
      %v1330 = vpop.f32.mrb[0].mxu0
      %v1331 = vpop.f32.mrb[0].mxu0
      %1332 = vdwg.mxu0
      %v1337 = vlaneseq
      %v1338 = vand.u32 %v1337, 127
      %v1339 = vlaneseq
      %v1340 = vshrl.u32 %v1339, 7
      %v1341 = vsub.s32 %v1338, %v1340
      %v1342 = vrot.slane %v1137, %v1341
      %v1343 = vlaneseq
      %v1344 = vshrl.u32 %v1343, 7
      %v1345 = vsub.s32 %v1338, %v1344
      %v1346 = vrot.slane %v1138, %v1345
      %v1347 = vlaneseq
      %v1348 = vshrl.u32 %v1347, 7
      %v1349 = vsub.s32 %v1338, %v1348
      %v1350 = vrot.slane %v1139, %v1349
      %v1351 = vlaneseq
      %v1352 = vshrl.u32 %v1351, 7
      %v1353 = vsub.s32 %v1338, %v1352
      %v1354 = vrot.slane %v1140, %v1353
      %vm1355 = vcmask 1042434
      %v1356 = vsel %vm1355, %v1342, %v1342
      %vm1357 = vcmask 1043459
      %v1358 = vsel %vm1357, %v1342, %v1356
      %vm1359 = vcmask 1044484
      %v1360 = vsel %vm1359, %v1342, %v1358
      %vm1361 = vcmask 1045509
      %v1362 = vsel %vm1361, %v1342, %v1360
      %vm1363 = vcmask 1046534
      %v1364 = vsel %vm1363, %v1342, %v1362
      %vm1365 = vcmask 1047559
      %v1366 = vsel %vm1365, %v1342, %v1364
      %v1367 = vsel %vm1355, %v1346, %v1346
      %v1368 = vsel %vm1357, %v1346, %v1367
      %v1369 = vsel %vm1359, %v1346, %v1368
      %v1370 = vsel %vm1361, %v1346, %v1369
      %v1371 = vsel %vm1363, %v1346, %v1370
      %v1372 = vsel %vm1365, %v1346, %v1371
      %v1373 = vsel %vm1355, %v1350, %v1350
      %v1374 = vsel %vm1357, %v1350, %v1373
      %v1375 = vsel %vm1359, %v1350, %v1374
      %v1376 = vsel %vm1361, %v1350, %v1375
      %v1377 = vsel %vm1363, %v1350, %v1376
      %v1378 = vsel %vm1365, %v1350, %v1377
      %v1379 = vsel %vm1355, %v1354, %v1354
      %v1380 = vsel %vm1357, %v1354, %v1379
      %v1381 = vsel %vm1359, %v1354, %v1380
      %v1382 = vsel %vm1361, %v1354, %v1381
      %v1383 = vsel %vm1363, %v1354, %v1382
      %v1384 = vsel %vm1365, %v1354, %v1383
      %v1389 = vmul.f32 %v1190, %v1366
      %v1390 = vmul.f32 %v1236, %v1372
      %v1391 = vmul.f32 %v1282, %v1378
      %v1392 = vmul.f32 %v1328, %v1384
      %1393 = vxpose.xlu0.b32.start [1/16] %v1389, 128
      %1394 = vxpose.xlu0.b32.cont [2/16] %v1390, 128
      %1395 = vxpose.xlu0.b32.cont [3/16] %v1391, 128
      %1396 = vxpose.xlu0.b32.cont [4/16] %v1392, 128
      %1397 = vxpose.xlu0.b32.cont [5/16] 0.0, 128
      %1398 = vxpose.xlu0.b32.cont [6/16] 0.0, 128
      %1399 = vxpose.xlu0.b32.cont [7/16] 0.0, 128
      %1400 = vxpose.xlu0.b32.cont [8/16] 0.0, 128
      %1401 = vxpose.xlu0.b32.cont [9/16] 0.0, 128
      %1402 = vxpose.xlu0.b32.cont [10/16] 0.0, 128
      %1403 = vxpose.xlu0.b32.cont [11/16] 0.0, 128
      %1404 = vxpose.xlu0.b32.cont [12/16] 0.0, 128
      %1405 = vxpose.xlu0.b32.cont [13/16] 0.0, 128
      %1406 = vxpose.xlu0.b32.cont [14/16] 0.0, 128
      %1407 = vxpose.xlu0.b32.cont [15/16] 0.0, 128
      %1408 = vxpose.xlu0.b32.end [16/16] 0.0, 128
      %v1409 = vpop.trf.xlu0
      %v1410 = vpop.trf.xlu0
      %v1411 = vpop.trf.xlu0
      %v1412 = vpop.trf.xlu0
      %v1413 = vpop.trf.xlu0
      %v1414 = vpop.trf.xlu0
      %v1415 = vpop.trf.xlu0
      %v1416 = vpop.trf.xlu0
      %v1417 = vpop.trf.xlu0
      %v1418 = vpop.trf.xlu0
      %v1419 = vpop.trf.xlu0
      %v1420 = vpop.trf.xlu0
      %v1421 = vpop.trf.xlu0
      %v1422 = vpop.trf.xlu0
      %v1423 = vpop.trf.xlu0
      %v1424 = vpop.trf.xlu0
      %v1425 = vpack.c.bf16 %v1409, %v1409
      %v1426 = vld [vmem:[%s610] sm:$0xf]
      %v1427 = vld [vmem:[%s610 + $0x4] sm:$0xf]
      %v1428 = vld [vmem:[%s610 + $0x8] sm:$0xf]
      %v1429 = vld [vmem:[%s610 + $0xc] sm:$0xf]
      %v1430 = vld [vmem:[%s613] sm:$0x1]
      %v1432 = vlaneseq
      %v1433 = vshrl.u32 %v1432, 7
      %v1434 = vsub.s32 0, %v1433
      %v1435 = vrot.slane %v1430, %v1434
      %v1441 = vunpack.c.l.b16 %v1426
      %v1442 = vunpack.c.l.b16 %v1427
      %v1443 = vunpack.c.l.b16 %v1428
      %v1444 = vunpack.c.l.b16 %v1429
      %v1445 = vpack.c.b16 %v1442, %v1441
      %v1446 = vpack.c.b16 %v1444, %v1443
      %v1450 = vsel %vm651, %v1425, 0
      %1452 = vmatprep.subr.bf16.mxu0 0
      %1453 = vmatpush1.bf16.msra.mxu0 %v1445
      %1454 = vmatprep.subr.bf16.mxu0 0
      %1455 = vmatpush1.bf16.msra.mxu0 %v1446
      %1456 = vmatprep.subr.bf16.mxu0 0
      %1457 = vmatpush1.bf16.msra.mxu0 0
      %1458 = vmatprep.subr.bf16.mxu0 0
      %1459 = vmatpush1.bf16.msra.mxu0 0
      %1460 = vmatprep.subr.bf16.mxu0 0
      %1461 = vmatpush1.bf16.msra.mxu0 0
      %1462 = vmatprep.subr.bf16.mxu0 0
      %1463 = vmatpush1.bf16.msra.mxu0 0
      %1464 = vmatprep.subr.bf16.mxu0 0
      %1465 = vmatpush1.bf16.msra.mxu0 0
      %1466 = vmatprep.subr.bf16.mxu0 0
      %1467 = vmatpush1.bf16.msra.mxu0 0
      %1468 = vmatprep.subr.bf16.mxu0 0
      %1469 = vmatpush1.bf16.msra.mxu0 0
      %1470 = vmatprep.subr.bf16.mxu0 0
      %1471 = vmatpush1.bf16.msra.mxu0 0
      %1472 = vmatprep.subr.bf16.mxu0 0
      %1473 = vmatpush1.bf16.msra.mxu0 0
      %1474 = vmatprep.subr.bf16.mxu0 0
      %1475 = vmatpush1.bf16.msra.mxu0 0
      %1476 = vmatprep.subr.bf16.mxu0 0
      %1477 = vmatpush1.bf16.msra.mxu0 0
      %1478 = vmatprep.subr.bf16.mxu0 0
      %1479 = vmatpush1.bf16.msra.mxu0 0
      %1480 = vmatprep.subr.bf16.mxu0 0
      %1481 = vmatpush1.bf16.msra.mxu0 0
      %1482 = vmatprep.subr.bf16.mxu0 0
      %1483 = vmatpush1.bf16.msra.mxu0 0
      %1484 = vmatprep.mubr.bf16.mxu0 0
      %1485 = vmatmul.mubr.bf16.gmra.mrb[0].mxu0 %v1450
      %v1486 = vpop.f32.mrb[0].mxu0
      %v1487 = vadd.f32 %v1435, %v1486
      %v1488 = vpop.f32.mrb[0].mxu0
      %v1489 = vpop.f32.mrb[0].mxu0
      %v1490 = vpop.f32.mrb[0].mxu0
      %1491 = vdwg.mxu0
      %v1492 = vadd.f32 %v648, %v1487
      %v1493 = vld [vmem:[%s616] sm:$0x1]
      %v1494 = vld [vmem:[%s619] sm:$0x1]
      %v1495 = vsel %vm651, %v1492, 0.0
      %1496 = vadd.xlane.f32.xlu0 %v1495
      %v1497 = vpop.xlane.xlu0 %1496
      %v1498 = vmul.f32 %v1497, %v655
      %v1499 = vsub.f32 %v1492, %v1498
      %v1500 = vmul.f32 %v1499, %v1499
      %v1501 = vsel %vm651, %v1500, 0.0
      %1502 = vadd.xlane.f32.xlu0 %v1501
      %v1503 = vpop.xlane.xlu0 %1502
      %v1504 = vmul.f32 %v1503, %v655
      %v1505 = vadd.f32 %v1504, 1e-05
      %v1506 = vrsqrt.pop %v1505
      %v1507 = vmul.f32 %v1499, %v1506
      %v1509 = vlaneseq
      %v1510 = vshrl.u32 %v1509, 7
      %v1511 = vsub.s32 0, %v1510
      %v1512 = vrot.slane %v1493, %v1511
      %v1514 = vmul.f32 %v1507, %v1512
      %v1516 = vlaneseq
      %v1517 = vshrl.u32 %v1516, 7
      %v1518 = vsub.s32 0, %v1517
      %v1519 = vrot.slane %v1494, %v1518
      %v1521 = vadd.f32 %v1514, %v1519
      %v1522 = vpack.c.bf16 %v1521, %v1521
      %v1523 = vld [vmem:[%s624] sm:$0xf]
      %v1524 = vld [vmem:[%s624 + $0x4] sm:$0xf]
      %v1525 = vld [vmem:[%s624 + $0x8] sm:$0xf]
      %v1526 = vld [vmem:[%s624 + $0xc] sm:$0xf]
      %v1527 = vld [vmem:[%s627] sm:$0x1]
      %v1529 = vlaneseq
      %v1530 = vshrl.u32 %v1529, 7
      %v1531 = vsub.s32 0, %v1530
      %v1532 = vrot.slane %v1527, %v1531
      %v1538 = vunpack.c.l.b16 %v1523
      %v1539 = vunpack.c.l.b16 %v1524
      %v1540 = vunpack.c.l.b16 %v1525
      %v1541 = vunpack.c.l.b16 %v1526
      %v1542 = vpack.c.b16 %v1539, %v1538
      %v1543 = vpack.c.b16 %v1541, %v1540
      %v1547 = vsel %vm651, %v1522, 0
      %1549 = vmatprep.subr.bf16.mxu0 0
      %1550 = vmatpush1.bf16.msra.mxu0 %v1542
      %1551 = vmatprep.subr.bf16.mxu0 0
      %1552 = vmatpush1.bf16.msra.mxu0 %v1543
      %1553 = vmatprep.subr.bf16.mxu0 0
      %1554 = vmatpush1.bf16.msra.mxu0 0
      %1555 = vmatprep.subr.bf16.mxu0 0
      %1556 = vmatpush1.bf16.msra.mxu0 0
      %1557 = vmatprep.subr.bf16.mxu0 0
      %1558 = vmatpush1.bf16.msra.mxu0 0
      %1559 = vmatprep.subr.bf16.mxu0 0
      %1560 = vmatpush1.bf16.msra.mxu0 0
      %1561 = vmatprep.subr.bf16.mxu0 0
      %1562 = vmatpush1.bf16.msra.mxu0 0
      %1563 = vmatprep.subr.bf16.mxu0 0
      %1564 = vmatpush1.bf16.msra.mxu0 0
      %1565 = vmatprep.subr.bf16.mxu0 0
      %1566 = vmatpush1.bf16.msra.mxu0 0
      %1567 = vmatprep.subr.bf16.mxu0 0
      %1568 = vmatpush1.bf16.msra.mxu0 0
      %1569 = vmatprep.subr.bf16.mxu0 0
      %1570 = vmatpush1.bf16.msra.mxu0 0
      %1571 = vmatprep.subr.bf16.mxu0 0
      %1572 = vmatpush1.bf16.msra.mxu0 0
      %1573 = vmatprep.subr.bf16.mxu0 0
      %1574 = vmatpush1.bf16.msra.mxu0 0
      %1575 = vmatprep.subr.bf16.mxu0 0
      %1576 = vmatpush1.bf16.msra.mxu0 0
      %1577 = vmatprep.subr.bf16.mxu0 0
      %1578 = vmatpush1.bf16.msra.mxu0 0
      %1579 = vmatprep.subr.bf16.mxu0 0
      %1580 = vmatpush1.bf16.msra.mxu0 0
      %1581 = vmatprep.mubr.bf16.mxu0 0
      %1582 = vmatmul.mubr.bf16.gmra.mrb[0].mxu0 %v1547
      %v1583 = vpop.f32.mrb[0].mxu0
      %v1584 = vadd.f32 %v1532, %v1583
      %v1585 = vpop.f32.mrb[0].mxu0
      %v1586 = vpop.f32.mrb[0].mxu0
      %v1587 = vpop.f32.mrb[0].mxu0
      %1588 = vdwg.mxu0
      %v1589 = vmul.f32 %v1584, 0.5
      %v1590 = vmul.f32 %v1584, 0.70710677
      %v1591 = verf.f32.pop %v1590
      %v1592 = vadd.f32 %v1591, 1.0
      %v1593 = vmul.f32 %v1589, %v1592
      %v1594 = vpack.c.bf16 %v1593, %v1593
      %v1595 = vld [vmem:[%s632] sm:$0xf]
      %v1596 = vld [vmem:[%s632 + $0x4] sm:$0xf]
      %v1597 = vld [vmem:[%s632 + $0x8] sm:$0xf]
      %v1598 = vld [vmem:[%s632 + $0xc] sm:$0xf]
      %v1599 = vld [vmem:[%s632 + $0x10] sm:$0xf]
      %v1600 = vld [vmem:[%s632 + $0x14] sm:$0xf]
      %v1601 = vld [vmem:[%s632 + $0x18] sm:$0xf]
      %v1602 = vld [vmem:[%s632 + $0x1c] sm:$0xf]
      %v1603 = vld [vmem:[%s632 + $0x20] sm:$0xf]
      %v1604 = vld [vmem:[%s632 + $0x24] sm:$0xf]
      %v1605 = vld [vmem:[%s632 + $0x28] sm:$0xf]
      %v1606 = vld [vmem:[%s632 + $0x2c] sm:$0xf]
      %v1607 = vld [vmem:[%s632 + $0x30] sm:$0xf]
      %v1608 = vld [vmem:[%s632 + $0x34] sm:$0xf]
      %v1609 = vld [vmem:[%s632 + $0x38] sm:$0xf]
      %v1610 = vld [vmem:[%s632 + $0x3c] sm:$0xf]
      %v1611 = vld [vmem:[%s635] sm:$0x1]
      %v1613 = vlaneseq
      %v1614 = vshrl.u32 %v1613, 7
      %v1615 = vsub.s32 0, %v1614
      %v1616 = vrot.slane %v1611, %v1615
      %v1634 = vunpack.c.l.b16 %v1595
      %v1635 = vunpack.c.l.b16 %v1596
      %v1636 = vunpack.c.l.b16 %v1597
      %v1637 = vunpack.c.l.b16 %v1598
      %v1638 = vunpack.c.l.b16 %v1599
      %v1639 = vunpack.c.l.b16 %v1600
      %v1640 = vunpack.c.l.b16 %v1601
      %v1641 = vunpack.c.l.b16 %v1602
      %v1642 = vunpack.c.l.b16 %v1603
      %v1643 = vunpack.c.l.b16 %v1604
      %v1644 = vunpack.c.l.b16 %v1605
      %v1645 = vunpack.c.l.b16 %v1606
      %v1646 = vunpack.c.l.b16 %v1607
      %v1647 = vunpack.c.l.b16 %v1608
      %v1648 = vunpack.c.l.b16 %v1609
      %v1649 = vunpack.c.l.b16 %v1610
      %v1650 = vpack.c.b16 %v1635, %v1634
      %v1651 = vpack.c.b16 %v1637, %v1636
      %v1652 = vpack.c.b16 %v1639, %v1638
      %v1653 = vpack.c.b16 %v1641, %v1640
      %v1654 = vpack.c.b16 %v1643, %v1642
      %v1655 = vpack.c.b16 %v1645, %v1644
      %v1656 = vpack.c.b16 %v1647, %v1646
      %v1657 = vpack.c.b16 %v1649, %v1648
      %1666 = vmatprep.subr.bf16.mxu0 0
      %1667 = vmatpush1.bf16.msra.mxu0 %v1650
      %1668 = vmatprep.subr.bf16.mxu0 0
      %1669 = vmatpush1.bf16.msra.mxu0 %v1651
      %1670 = vmatprep.subr.bf16.mxu0 0
      %1671 = vmatpush1.bf16.msra.mxu0 %v1652
      %1672 = vmatprep.subr.bf16.mxu0 0
      %1673 = vmatpush1.bf16.msra.mxu0 %v1653
      %1674 = vmatprep.subr.bf16.mxu0 0
      %1675 = vmatpush1.bf16.msra.mxu0 %v1654
      %1676 = vmatprep.subr.bf16.mxu0 0
      %1677 = vmatpush1.bf16.msra.mxu0 %v1655
      %1678 = vmatprep.subr.bf16.mxu0 0
      %1679 = vmatpush1.bf16.msra.mxu0 %v1656
      %1680 = vmatprep.subr.bf16.mxu0 0
      %1681 = vmatpush1.bf16.msra.mxu0 %v1657
      %1682 = vmatprep.subr.bf16.mxu0 0
      %1683 = vmatpush1.bf16.msra.mxu0 0
      %1684 = vmatprep.subr.bf16.mxu0 0
      %1685 = vmatpush1.bf16.msra.mxu0 0
      %1686 = vmatprep.subr.bf16.mxu0 0
      %1687 = vmatpush1.bf16.msra.mxu0 0
      %1688 = vmatprep.subr.bf16.mxu0 0
      %1689 = vmatpush1.bf16.msra.mxu0 0
      %1690 = vmatprep.subr.bf16.mxu0 0
      %1691 = vmatpush1.bf16.msra.mxu0 0
      %1692 = vmatprep.subr.bf16.mxu0 0
      %1693 = vmatpush1.bf16.msra.mxu0 0
      %1694 = vmatprep.subr.bf16.mxu0 0
      %1695 = vmatpush1.bf16.msra.mxu0 0
      %1696 = vmatprep.subr.bf16.mxu0 0
      %1697 = vmatpush1.bf16.msra.mxu0 0
      %1698 = vmatprep.mubr.bf16.mxu0 0
      %1699 = vmatmul.mubr.bf16.gmra.mrb[0].mxu0 %v1594
      %v1700 = vpop.f32.mrb[0].mxu0
      %v1701 = vadd.f32 %v1616, %v1700
      %v1702 = vpop.f32.mrb[0].mxu0
      %v1703 = vpop.f32.mrb[0].mxu0
      %v1704 = vpop.f32.mrb[0].mxu0
      %1705 = vdwg.mxu0
      %v1706 = vadd.f32 %v1492, %v1701
      %1707 = vst.msk [vmem:[#allocation2] sm:$0xff] %vm651, %v1706
      %p1708 = scmp.eq.s32.totalorder %s29, 1
      // Predicated region
      $region77: #{transformer_forward.1} parent=71 // pred_check
        %p1709 = pneg %p1708
      $region78: #{transformer_forward.1} parent=71 // pred_check_branch
        %1711 = sbr.rel (%p1709) target = $region80
      $region79: #{transformer_forward.1} parent=71 // pred_region
        %1712 = vst.msk [vmem:[%s639] sm:$0xff] %vm651, %v1706
      $region80: #{transformer_forward.1} parent=71 // pred_fallthru
        _
      %p1713 = scmp.lt.s32.totalorder %s28, 1
      %s1714 = scalar_select %p1713, %s28, 1
      %s1715 = smul.addr %s1714, 8
      %s1716 = scalar_lea.vmem %s13, %s1715
      // Predicated region
      $region81: #{transformer_forward.1} parent=71 // pred_check
        %p1717 = pneg %p392
      $region82: #{transformer_forward.1} parent=71 // pred_check_branch
        %1719 = sbr.rel (%p1717) target = $region84
      $region83: #{transformer_forward.1} parent=71 // pred_region
        _
      $region84: #{transformer_forward.1} parent=71 // pred_fallthru
        _
    $region72: #{transformer_forward.1} parent=5 // pred_fallthru
      _
    %p1720 = scmp.le.s32.totalorder 2, %s19
    // Predicated region
    $region85: #{transformer_forward.1} parent=5 // pred_check
      %p1721 = pneg %p1720
    $region86: #{transformer_forward.1} parent=5 // pred_check_branch
      %1723 = sbr.rel (%p1721) target = $region88
    $region87: #{transformer_forward.1} parent=5 // pred_region
      %s1724 = ssub.s32 %s19, 2
      // Predicated region
      $region89: #{transformer_forward.1} parent=87 // pred_check
        %p1725 = pneg %p398
      $region90: #{transformer_forward.1} parent=87 // pred_check_branch
        %1727 = sbr.rel (%p1725) target = $region92
      $region91: #{transformer_forward.1} parent=87 // pred_region
        %p1728 = scmp.lt.s32.totalorder %s30, 1
        %s1729 = scalar_select %p1728, %s30, 1
        %s1730 = smul.addr %s1729, 8
        %s1731 = scalar_lea.vmem %s13, %s1730
      $region92: #{transformer_forward.1} parent=87 // pred_fallthru
        _
    $region88: #{transformer_forward.1} parent=5 // pred_fallthru
      _
  $region6: #{transformer_forward.1} parent=0 // loop_footer
    %s23 = sadd.s32 1, %s19
  $region7: #{transformer_forward.1} parent=0 // loop_footer_branch
    %18 = sbr.rel target = $region3
  $region8: #{transformer_forward.1} parent=0 // loop_exit
    _

</llo_original>
